<compile_context>
chip_gen: v6e
topology: v6e:2x2x1
jax: 0.10.0
libtpu: 0.0.40
codegen_flags: <defaults>
</compile_context>

<pallas_src>
import functools

import jax
import jax.numpy as jnp
from jax.experimental import pallas as pl
from jax.experimental.pallas import tpu as pltpu


def _round_up(x, m):
    return (x + m - 1) // m * m


def _mlp_kernel(num_hidden, ids_ref, utab_ref, itab_ref, *rest):
    """Fused NCF-MLP forward for one batch tile (transposed orientation).

    ids_ref : (2, TILE_B) int32   -- row 0 = user ids, row 1 = item ids
    utab_ref: (H0, num_users)     -- user table with FC0 weights + b0 folded in
    itab_ref: (H0, num_items)     -- item table with FC0 weights folded in
    rest    : [w1_t, b1, ..., w_out_t, b_out, out_ref]; w_t is (out, in),
              biases are (out, 1); out_ref is (1, TILE_B).
    """
    out_ref = rest[-1]
    params = rest[:-1]

    tile_b = ids_ref.shape[1]
    num_users = utab_ref.shape[1]
    num_items = itab_ref.shape[1]
    dot_dtype = utab_ref.dtype

    ids = ids_ref[...]
    uid = ids[0:1, :]                                    # (1, TILE_B)
    iid = ids[1:2, :]                                    # (1, TILE_B)

    # Embedding gather fused as a one-hot matmul against the VMEM-resident,
    # FC0-folded tables (feature axis on sublanes, batch on lanes).  Because
    # FC0 and b0 are folded in, this *is* the layer-0 pre-activation.
    # NOTE: out-of-range ids produce a zero row (no one-hot match) rather than
    # the reference gather semantics.
    # TODO(synk): for large tables, replace the one-hot gather with a
    # scalar-prefetch DMA gather (tables in memory_space=pl.ANY + double
    # buffered pltpu.make_async_copy) so VMEM/compute stop scaling with
    # num_users / num_items.
    u_iota = jax.lax.broadcasted_iota(jnp.int32, (num_users, tile_b), 0)
    i_iota = jax.lax.broadcasted_iota(jnp.int32, (num_items, tile_b), 0)
    onehot_u = (u_iota == uid).astype(dot_dtype)         # (num_users, TILE_B)
    onehot_i = (i_iota == iid).astype(dot_dtype)         # (num_items, TILE_B)

    z = jnp.dot(utab_ref[...], onehot_u, preferred_element_type=jnp.float32)
    z = z + jnp.dot(itab_ref[...], onehot_i, preferred_element_type=jnp.float32)
    x = jnp.maximum(z, 0.0)                              # (H0, TILE_B) f32

    # Remaining hidden Linear + ReLU layers, all as W^T @ x (batch on lanes).
    for i in range(num_hidden):
        w_t = params[2 * i][...]                         # (out, in)
        b = params[2 * i + 1][...]                       # (out, 1) f32
        z = jnp.dot(w_t, x.astype(dot_dtype), preferred_element_type=jnp.float32)
        x = jnp.maximum(z + b, 0.0)

    # Final affine + sigmoid -> lane-dense (1, TILE_B) store.
    w_out_t = params[2 * num_hidden][...]                # (1, H_last)
    b_out = params[2 * num_hidden + 1][...]              # (1, 1) f32
    logits = jnp.dot(w_out_t, x.astype(dot_dtype),
                     preferred_element_type=jnp.float32)
    out_ref[...] = jax.nn.sigmoid(logits + b_out).astype(out_ref.dtype)


def mlp_forward_pallas(users, items, user_table, item_table,
                       fc_weights, fc_biases, w_out, b_out,
                       *, max_tile_b=2048, use_bf16=True):
    """users/items: (B,) int ids; returns (B, 1) float32 ratings."""
    B = users.shape[0]
    latent_dim = user_table.shape[1]
    num_hidden = len(fc_weights) - 1           # FC0 is folded into the tables
    dot_dtype = jnp.bfloat16 if use_bf16 else jnp.float32

    # ---- Batch tiling -------------------------------------------------------
    # Lane-dense tiles (multiple of 128); when B allows, >= 2 grid steps so
    # dimension_semantics=("parallel",) actually shards across v7x's 2 cores.
    # max_tile_b=2048 keeps per-step VMEM modest; drop to ~1024 on v7x (64 MiB
    # VMEM) if tables grow while the one-hot gather is still in use.
    tile_b = min(max_tile_b, max(128, _round_up(-(-B // 2), 128)))
    b_pad = _round_up(B, tile_b)
    grid = (b_pad // tile_b,)

    # Lane-dense ids: one (2, b_pad) int32 array (row 0 = users, row 1 = items).
    # Padded columns use id 0 and are sliced off after the call.
    ids = jnp.zeros((2, b_pad), jnp.int32)
    ids = ids.at[0, :B].set(users.astype(jnp.int32))
    ids = ids.at[1, :B].set(items.astype(jnp.int32))

    # ---- Fold FC0 (+ b0) into the embedding tables; transpose everything ----
    w0 = fc_weights[0]                                     # (2*latent, H0)
    w0_u, w0_i = w0[:latent_dim], w0[latent_dim:]
    hi = jax.lax.Precision.HIGHEST
    utab_folded = jnp.dot(user_table, w0_u, precision=hi) + fc_biases[0]
    itab_folded = jnp.dot(item_table, w0_i, precision=hi)
    utab_t = utab_folded.T.astype(dot_dtype)               # (H0, num_users)
    itab_t = itab_folded.T.astype(dot_dtype)               # (H0, num_items)

    params = []
    for w, b in zip(fc_weights[1:], fc_biases[1:]):
        params.append(w.T.astype(dot_dtype))               # (out, in)
        params.append(b.reshape(-1, 1).astype(jnp.float32))
    params.append(w_out.reshape(1, -1).astype(dot_dtype))  # (1, H_last)
    params.append(b_out.reshape(1, 1).astype(jnp.float32))

    # ---- Explicit VMEM budget ----------------------------------------------
    itemsize = jnp.dtype(dot_dtype).itemsize
    resident = sum(int(p.size) * p.dtype.itemsize
                   for p in (utab_t, itab_t, *params))
    hidden_dims = [w.shape[1] for w in fc_weights]          # layers[1:]
    per_step = tile_b * (user_table.shape[0] + item_table.shape[0]) * itemsize
    per_step += tile_b * sum(hidden_dims) * (4 + itemsize)  # f32 act + cast copy
    per_step += 2 * tile_b * (2 * 4 + 4)                    # dbl-buffered ids+out
    vmem_limit = int(max(32 << 20, min(2 * (resident + 2 * per_step), 64 << 20)))

    kernel = functools.partial(_mlp_kernel, num_hidden)
    out_spec = pl.BlockSpec((1, tile_b), lambda i: (0, i))  # lane-dense output

    def _call(single_buffer_params):
        def const_spec(shape):
            # Constant-index (VMEM-resident) inputs: single buffer when supported.
            if single_buffer_params:
                return pl.BlockSpec(shape, lambda i: (0, 0),
                                    pipeline_mode=pl.Buffered(1))
            return pl.BlockSpec(shape, lambda i: (0, 0))

        in_specs = [pl.BlockSpec((2, tile_b), lambda i: (0, i))]  # streamed ids
        in_specs += [const_spec(utab_t.shape), const_spec(itab_t.shape)]
        in_specs += [const_spec(p.shape) for p in params]

        out = pl.pallas_call(
            kernel,
            out_shape=jax.ShapeDtypeStruct((1, b_pad), jnp.float32),
            grid_spec=pltpu.PrefetchScalarGridSpec(
                num_scalar_prefetch=0,
                grid=grid,
                in_specs=in_specs,
                out_specs=out_spec,
            ),
            compiler_params=pltpu.CompilerParams(
                dimension_semantics=("parallel",),      # batch axis -> megacore
                vmem_limit_bytes=vmem_limit,
            ),
        )(ids, utab_t, itab_t, *params)
        return jax.block_until_ready(out)

    try:
        out = _call(True)
    except Exception:
        # pipeline_mode=pl.Buffered(1) not accepted on this jax version:
        # fall back to default double-buffering of the constant inputs.
        out = _call(False)

    return out[0, :B].reshape(B, 1)


class MLPPallas:
    """JAX/Pallas re-implementation of NCF/layers.py::MLP forward pass."""

    def __init__(self, config, key):
        self.num_users = config["num_users"]
        self.num_items = config["num_items"]
        self.latent_dim = config["latent_dim"]
        self.layers = config["layers"]
        assert self.layers[0] == 2 * self.latent_dim, \
            "layers[0] must equal 2*latent_dim (concat of user/item embeddings)"

        keys = jax.random.split(key, 3 + 2 * len(self.layers))
        k_iter = iter(keys)

        # nn.Embedding default init: N(0, 1)
        self.embedding_user = jax.random.normal(
            next(k_iter), (self.num_users, self.latent_dim), dtype=jnp.float32)
        self.embedding_item = jax.random.normal(
            next(k_iter), (self.num_items, self.latent_dim), dtype=jnp.float32)

        # nn.Linear default init: U(-1/sqrt(in), 1/sqrt(in)) for weight & bias.
        # Weights stored as (in_features, out_features): reference is x @ W + b.
        self.fc_weights = []
        self.fc_biases = []
        for i in range(len(self.layers) - 1):
            fan_in = self.layers[i]
            bound = 1.0 / jnp.sqrt(jnp.float32(fan_in))
            w = jax.random.uniform(next(k_iter),
                                   (self.layers[i], self.layers[i + 1]),
                                   minval=-bound, maxval=bound,
                                   dtype=jnp.float32)
            b = jax.random.uniform(next(k_iter), (self.layers[i + 1],),
                                   minval=-bound, maxval=bound,
                                   dtype=jnp.float32)
            self.fc_weights.append(w)
            self.fc_biases.append(b)

        fan_in = self.layers[-1]
        bound = 1.0 / jnp.sqrt(jnp.float32(fan_in))
        self.w_out = jax.random.uniform(next(k_iter), (self.layers[-1], 1),
                                        minval=-bound, maxval=bound,
                                        dtype=jnp.float32)
        self.b_out = jax.random.uniform(next(k_iter), (1,),
                                        minval=-bound, maxval=bound,
                                        dtype=jnp.float32)

    def __call__(self, users, items, *, use_bf16=True):
        # Gather + concat + MLP + sigmoid are all fused inside the kernel.
        return mlp_forward_pallas(users, items,
                                  self.embedding_user, self.embedding_item,
                                  self.fc_weights, self.fc_biases,
                                  self.w_out, self.b_out,
                                  use_bf16=use_bf16)

    def reference(self, users, items):
        """Pure-JAX reference for correctness check (original concat form)."""
        user_emb = self.embedding_user[users]
        item_emb = self.embedding_item[items]
        x = jnp.concatenate([user_emb, item_emb], axis=1)
        for w, b in zip(self.fc_weights, self.fc_biases):
            x = jnp.maximum(x @ w + b, 0.0)
        return jax.nn.sigmoid(x @ self.w_out + self.b_out)


if __name__ == "__main__":
    config = {
        "num_users": 16,
        "num_items": 24,
        "latent_dim": 16,
        "layers": [32, 64, 32, 16],   # layers[0] == 2 * latent_dim
    }

    key = jax.random.PRNGKey(0)
    k_model, k_u, k_i = jax.random.split(key, 3)

    model = MLPPallas(config, k_model)

    B = 8
    users = jax.random.randint(k_u, (B,), 0, config["num_users"], dtype=jnp.int32)
    items = jax.random.randint(k_i, (B,), 0, config["num_items"], dtype=jnp.int32)

    ref = model.reference(users, items)

    # Exact (f32 MXU operand) path: tight tolerance against the reference.
    out_f32 = jax.block_until_ready(model(users, items, use_bf16=False))
    assert out_f32.shape == (B, 1), out_f32.shape
    assert jnp.allclose(out_f32, ref, atol=1e-4, rtol=1e-4), (out_f32, ref)

    # Default performance path: bf16 MXU operands with f32 accumulation.
    out_bf16 = jax.block_until_ready(model(users, items))
    assert out_bf16.shape == (B, 1), out_bf16.shape
    assert jnp.allclose(out_bf16, ref, atol=3e-2, rtol=3e-2), (out_bf16, ref)

    print("KERNEL_OK")
</pallas_src>

<mosaic_0001>
module attributes {stable_mosaic.version = 11 : i64} {
  func.func @_mlp_kernel(%arg0: i32, %arg1: memref<2x128xi32, #tpu.memory_space<vmem>>, %arg2: memref<64x16xf32, #tpu.memory_space<vmem>>, %arg3: memref<64x24xf32, #tpu.memory_space<vmem>>, %arg4: memref<32x64xf32, #tpu.memory_space<vmem>>, %arg5: memref<32x1xf32, #tpu.memory_space<vmem>>, %arg6: memref<16x32xf32, #tpu.memory_space<vmem>>, %arg7: memref<16x1xf32, #tpu.memory_space<vmem>>, %arg8: memref<1x16xf32, #tpu.memory_space<vmem>>, %arg9: memref<1x1xf32, #tpu.memory_space<vmem>>, %arg10: memref<1x128xf32, #tpu.memory_space<vmem>>) attributes {dimension_semantics = [#tpu.dimension_semantics<parallel>], iteration_bounds = array<i64: 1>, scalar_prefetch = 0 : i64, scratch_operands = 0 : i64, tpu.core_type = #tpu.core_type<tc>, window_params = [{transform_indices = @transform_0, window_bounds = array<i64: 2, 128>}, {pipeline_mode = #tpu.pipeline_mode<synchronous>, transform_indices = @transform_1, window_bounds = array<i64: 64, 16>}, {pipeline_mode = #tpu.pipeline_mode<synchronous>, transform_indices = @transform_2, window_bounds = array<i64: 64, 24>}, {pipeline_mode = #tpu.pipeline_mode<synchronous>, transform_indices = @transform_3, window_bounds = array<i64: 32, 64>}, {pipeline_mode = #tpu.pipeline_mode<synchronous>, transform_indices = @transform_4, window_bounds = array<i64: 32, 1>}, {pipeline_mode = #tpu.pipeline_mode<synchronous>, transform_indices = @transform_5, window_bounds = array<i64: 16, 32>}, {pipeline_mode = #tpu.pipeline_mode<synchronous>, transform_indices = @transform_6, window_bounds = array<i64: 16, 1>}, {pipeline_mode = #tpu.pipeline_mode<synchronous>, transform_indices = @transform_7, window_bounds = array<i64: 1, 16>}, {pipeline_mode = #tpu.pipeline_mode<synchronous>, transform_indices = @transform_8, window_bounds = array<i64: 1, 1>}, {transform_indices = @transform_9, window_bounds = array<i64: 1, 128>}]} {
    %c0 = arith.constant 0 : index
    %c0_0 = arith.constant 0 : index
    %0 = vector.load %arg1[%c0, %c0_0] : memref<2x128xi32, #tpu.memory_space<vmem>>, vector<2x128xi32>
    %1 = vector.extract_strided_slice %0 {offsets = [0, 0], sizes = [1, 128], strides = [1, 1]} : vector<2x128xi32> to vector<1x128xi32>
    %2 = vector.extract_strided_slice %0 {offsets = [1, 0], sizes = [1, 128], strides = [1, 1]} : vector<2x128xi32> to vector<1x128xi32>
    %3 = tpu.iota {dimensions = array<i32: 0>} : vector<16x128xi32>
    %4 = tpu.iota {dimensions = array<i32: 0>} : vector<24x128xi32>
    %5 = vector.broadcast %1 : vector<1x128xi32> to vector<16x128xi32>
    %6 = arith.cmpi eq, %3, %5 : vector<16x128xi32>
    %7 = arith.extui %6 : vector<16x128xi1> to vector<16x128xi32>
    %8 = arith.sitofp %7 : vector<16x128xi32> to vector<16x128xf32>
    %9 = vector.broadcast %2 : vector<1x128xi32> to vector<24x128xi32>
    %10 = arith.cmpi eq, %4, %9 : vector<24x128xi32>
    %11 = arith.extui %10 : vector<24x128xi1> to vector<24x128xi32>
    %12 = arith.sitofp %11 : vector<24x128xi32> to vector<24x128xf32>
    %c0_1 = arith.constant 0 : index
    %c0_2 = arith.constant 0 : index
    %13 = vector.load %arg2[%c0_1, %c0_2] : memref<64x16xf32, #tpu.memory_space<vmem>>, vector<64x16xf32>
    %cst = arith.constant dense<0.000000e+00> : vector<64x128xf32>
    %14 = tpu.matmul %13, %8, %cst {dimension_numbers = #tpu.dot_dimension_numbers<[1], [0], [0], [1], [0, 0, 1, 1], [], []>} : vector<64x16xf32>, vector<16x128xf32>, vector<64x128xf32> -> vector<64x128xf32>
    %c0_3 = arith.constant 0 : index
    %c0_4 = arith.constant 0 : index
    %15 = vector.load %arg3[%c0_3, %c0_4] : memref<64x24xf32, #tpu.memory_space<vmem>>, vector<64x24xf32>
    %cst_5 = arith.constant dense<0.000000e+00> : vector<64x128xf32>
    %16 = tpu.matmul %15, %12, %cst_5 {dimension_numbers = #tpu.dot_dimension_numbers<[1], [0], [0], [1], [0, 0, 1, 1], [], []>} : vector<64x24xf32>, vector<24x128xf32>, vector<64x128xf32> -> vector<64x128xf32>
    %17 = arith.addf %14, %16 : vector<64x128xf32>
    %cst_6 = arith.constant 0.000000e+00 : f32
    %18 = vector.broadcast %cst_6 : f32 to vector<64x128xf32>
    %19 = arith.maximumf %17, %18 : vector<64x128xf32>
    %c0_7 = arith.constant 0 : index
    %c0_8 = arith.constant 0 : index
    %20 = vector.load %arg4[%c0_7, %c0_8] : memref<32x64xf32, #tpu.memory_space<vmem>>, vector<32x64xf32>
    %c0_9 = arith.constant 0 : index
    %c0_10 = arith.constant 0 : index
    %21 = vector.load %arg5[%c0_9, %c0_10] : memref<32x1xf32, #tpu.memory_space<vmem>>, vector<32x1xf32>
    %cst_11 = arith.constant dense<0.000000e+00> : vector<32x128xf32>
    %22 = tpu.matmul %20, %19, %cst_11 {dimension_numbers = #tpu.dot_dimension_numbers<[1], [0], [0], [1], [0, 0, 1, 1], [], []>} : vector<32x64xf32>, vector<64x128xf32>, vector<32x128xf32> -> vector<32x128xf32>
    %23 = vector.broadcast %21 : vector<32x1xf32> to vector<32x128xf32>
    %24 = arith.addf %22, %23 : vector<32x128xf32>
    %cst_12 = arith.constant 0.000000e+00 : f32
    %25 = vector.broadcast %cst_12 : f32 to vector<32x128xf32>
    %26 = arith.maximumf %24, %25 : vector<32x128xf32>
    %c0_13 = arith.constant 0 : index
    %c0_14 = arith.constant 0 : index
    %27 = vector.load %arg6[%c0_13, %c0_14] : memref<16x32xf32, #tpu.memory_space<vmem>>, vector<16x32xf32>
    %c0_15 = arith.constant 0 : index
    %c0_16 = arith.constant 0 : index
    %28 = vector.load %arg7[%c0_15, %c0_16] : memref<16x1xf32, #tpu.memory_space<vmem>>, vector<16x1xf32>
    %cst_17 = arith.constant dense<0.000000e+00> : vector<16x128xf32>
    %29 = tpu.matmul %27, %26, %cst_17 {dimension_numbers = #tpu.dot_dimension_numbers<[1], [0], [0], [1], [0, 0, 1, 1], [], []>} : vector<16x32xf32>, vector<32x128xf32>, vector<16x128xf32> -> vector<16x128xf32>
    %30 = vector.broadcast %28 : vector<16x1xf32> to vector<16x128xf32>
    %31 = arith.addf %29, %30 : vector<16x128xf32>
    %cst_18 = arith.constant 0.000000e+00 : f32
    %32 = vector.broadcast %cst_18 : f32 to vector<16x128xf32>
    %33 = arith.maximumf %31, %32 : vector<16x128xf32>
    %c0_19 = arith.constant 0 : index
    %c0_20 = arith.constant 0 : index
    %34 = vector.load %arg8[%c0_19, %c0_20] : memref<1x16xf32, #tpu.memory_space<vmem>>, vector<1x16xf32>
    %c0_21 = arith.constant 0 : index
    %c0_22 = arith.constant 0 : index
    %35 = vector.load %arg9[%c0_21, %c0_22] : memref<1x1xf32, #tpu.memory_space<vmem>>, vector<1x1xf32>
    %cst_23 = arith.constant dense<0.000000e+00> : vector<1x128xf32>
    %36 = tpu.matmul %34, %33, %cst_23 {dimension_numbers = #tpu.dot_dimension_numbers<[1], [0], [0], [1], [0, 0, 1, 1], [], []>} : vector<1x16xf32>, vector<16x128xf32>, vector<1x128xf32> -> vector<1x128xf32>
    %37 = vector.broadcast %35 : vector<1x1xf32> to vector<1x128xf32>
    %38 = arith.addf %36, %37 : vector<1x128xf32>
    %39 = arith.negf %38 : vector<1x128xf32>
    %40 = math.exp %39 : vector<1x128xf32>
    %cst_24 = arith.constant 1.000000e+00 : f32
    %41 = vector.broadcast %cst_24 : f32 to vector<1x128xf32>
    %42 = arith.addf %41, %40 : vector<1x128xf32>
    %43 = arith.divf %41, %42 : vector<1x128xf32>
    %c0_25 = arith.constant 0 : index
    %c0_26 = arith.constant 0 : index
    %44 = vector.load %arg10[%c0_25, %c0_26] : memref<1x128xf32, #tpu.memory_space<vmem>>, vector<1x128xf32>
    tpu.vector_store %arg10[%c0_25, %c0_26], %43 {strides = array<i32>} : memref<1x128xf32, #tpu.memory_space<vmem>>, vector<1x128xf32>,
    return
  }
  func.func @transform_0(%arg0: i32) -> (i32, i32) {
    %c0_i32 = arith.constant 0 : i32
    %c0_i32_0 = arith.constant 0 : i32
    return %c0_i32, %arg0 : i32, i32
  }
  func.func @transform_1(%arg0: i32) -> (i32, i32) {
    %c0_i32 = arith.constant 0 : i32
    %c0_i32_0 = arith.constant 0 : i32
    %c0_i32_1 = arith.constant 0 : i32
    return %c0_i32, %c0_i32_0 : i32, i32
  }
  func.func @transform_2(%arg0: i32) -> (i32, i32) {
    %c0_i32 = arith.constant 0 : i32
    %c0_i32_0 = arith.constant 0 : i32
    %c0_i32_1 = arith.constant 0 : i32
    return %c0_i32, %c0_i32_0 : i32, i32
  }
  func.func @transform_3(%arg0: i32) -> (i32, i32) {
    %c0_i32 = arith.constant 0 : i32
    %c0_i32_0 = arith.constant 0 : i32
    %c0_i32_1 = arith.constant 0 : i32
    return %c0_i32, %c0_i32_0 : i32, i32
  }
  func.func @transform_4(%arg0: i32) -> (i32, i32) {
    %c0_i32 = arith.constant 0 : i32
    %c0_i32_0 = arith.constant 0 : i32
    %c0_i32_1 = arith.constant 0 : i32
    return %c0_i32, %c0_i32_0 : i32, i32
  }
  func.func @transform_5(%arg0: i32) -> (i32, i32) {
    %c0_i32 = arith.constant 0 : i32
    %c0_i32_0 = arith.constant 0 : i32
    %c0_i32_1 = arith.constant 0 : i32
    return %c0_i32, %c0_i32_0 : i32, i32
  }
  func.func @transform_6(%arg0: i32) -> (i32, i32) {
    %c0_i32 = arith.constant 0 : i32
    %c0_i32_0 = arith.constant 0 : i32
    %c0_i32_1 = arith.constant 0 : i32
    return %c0_i32, %c0_i32_0 : i32, i32
  }
  func.func @transform_7(%arg0: i32) -> (i32, i32) {
    %c0_i32 = arith.constant 0 : i32
    %c0_i32_0 = arith.constant 0 : i32
    %c0_i32_1 = arith.constant 0 : i32
    return %c0_i32, %c0_i32_0 : i32, i32
  }
  func.func @transform_8(%arg0: i32) -> (i32, i32) {
    %c0_i32 = arith.constant 0 : i32
    %c0_i32_0 = arith.constant 0 : i32
    %c0_i32_1 = arith.constant 0 : i32
    return %c0_i32, %c0_i32_0 : i32, i32
  }
  func.func @transform_9(%arg0: i32) -> (i32, i32) {
    %c0_i32 = arith.constant 0 : i32
    %c0_i32_0 = arith.constant 0 : i32
    return %c0_i32, %arg0 : i32, i32
  }
}

module attributes {stable_mosaic.version = 11 : i64} {
  func.func @_mlp_kernel(%arg0: i32, %arg1: memref<2x128xi32, #tpu.memory_space<vmem>>, %arg2: memref<64x16xf32, #tpu.memory_space<vmem>>, %arg3: memref<64x24xf32, #tpu.memory_space<vmem>>, %arg4: memref<32x64xf32, #tpu.memory_space<vmem>>, %arg5: memref<32x1xf32, #tpu.memory_space<vmem>>, %arg6: memref<16x32xf32, #tpu.memory_space<vmem>>, %arg7: memref<16x1xf32, #tpu.memory_space<vmem>>, %arg8: memref<1x16xf32, #tpu.memory_space<vmem>>, %arg9: memref<1x1xf32, #tpu.memory_space<vmem>>, %arg10: memref<1x128xf32, #tpu.memory_space<vmem>>) attributes {dimension_semantics = [#tpu.dimension_semantics<parallel>], iteration_bounds = array<i64: 1>, scalar_prefetch = 0 : i64, scratch_operands = 0 : i64, tpu.core_type = #tpu.core_type<tc>, window_params = [{transform_indices = @transform_0, window_bounds = array<i64: 2, 128>}, {pipeline_mode = #tpu.pipeline_mode<synchronous>, transform_indices = @transform_1, window_bounds = array<i64: 64, 16>}, {pipeline_mode = #tpu.pipeline_mode<synchronous>, transform_indices = @transform_2, window_bounds = array<i64: 64, 24>}, {pipeline_mode = #tpu.pipeline_mode<synchronous>, transform_indices = @transform_3, window_bounds = array<i64: 32, 64>}, {pipeline_mode = #tpu.pipeline_mode<synchronous>, transform_indices = @transform_4, window_bounds = array<i64: 32, 1>}, {pipeline_mode = #tpu.pipeline_mode<synchronous>, transform_indices = @transform_5, window_bounds = array<i64: 16, 32>}, {pipeline_mode = #tpu.pipeline_mode<synchronous>, transform_indices = @transform_6, window_bounds = array<i64: 16, 1>}, {pipeline_mode = #tpu.pipeline_mode<synchronous>, transform_indices = @transform_7, window_bounds = array<i64: 1, 16>}, {pipeline_mode = #tpu.pipeline_mode<synchronous>, transform_indices = @transform_8, window_bounds = array<i64: 1, 1>}, {transform_indices = @transform_9, window_bounds = array<i64: 1, 128>}]} {
    %c0 = arith.constant 0 : index
    %c0_0 = arith.constant 0 : index
    %0 = vector.load %arg1[%c0, %c0_0] : memref<2x128xi32, #tpu.memory_space<vmem>>, vector<2x128xi32>
    %1 = vector.extract_strided_slice %0 {offsets = [0, 0], sizes = [1, 128], strides = [1, 1]} : vector<2x128xi32> to vector<1x128xi32>
    %2 = vector.extract_strided_slice %0 {offsets = [1, 0], sizes = [1, 128], strides = [1, 1]} : vector<2x128xi32> to vector<1x128xi32>
    %3 = tpu.iota {dimensions = array<i32: 0>} : vector<16x128xi32>
    %4 = tpu.iota {dimensions = array<i32: 0>} : vector<24x128xi32>
    %5 = vector.broadcast %1 : vector<1x128xi32> to vector<16x128xi32>
    %6 = arith.cmpi eq, %3, %5 : vector<16x128xi32>
    %7 = arith.extui %6 : vector<16x128xi1> to vector<16x128xi32>
    %8 = arith.sitofp %7 : vector<16x128xi32> to vector<16x128xf32>
    %9 = vector.broadcast %2 : vector<1x128xi32> to vector<24x128xi32>
    %10 = arith.cmpi eq, %4, %9 : vector<24x128xi32>
    %11 = arith.extui %10 : vector<24x128xi1> to vector<24x128xi32>
    %12 = arith.sitofp %11 : vector<24x128xi32> to vector<24x128xf32>
    %c0_1 = arith.constant 0 : index
    %c0_2 = arith.constant 0 : index
    %13 = vector.load %arg2[%c0_1, %c0_2] : memref<64x16xf32, #tpu.memory_space<vmem>>, vector<64x16xf32>
    %cst = arith.constant dense<0.000000e+00> : vector<64x128xf32>
    %14 = tpu.matmul %13, %8, %cst {dimension_numbers = #tpu.dot_dimension_numbers<[1], [0], [0], [1], [0, 0, 1, 1], [], []>} : vector<64x16xf32>, vector<16x128xf32>, vector<64x128xf32> -> vector<64x128xf32>
    %c0_3 = arith.constant 0 : index
    %c0_4 = arith.constant 0 : index
    %15 = vector.load %arg3[%c0_3, %c0_4] : memref<64x24xf32, #tpu.memory_space<vmem>>, vector<64x24xf32>
    %cst_5 = arith.constant dense<0.000000e+00> : vector<64x128xf32>
    %16 = tpu.matmul %15, %12, %cst_5 {dimension_numbers = #tpu.dot_dimension_numbers<[1], [0], [0], [1], [0, 0, 1, 1], [], []>} : vector<64x24xf32>, vector<24x128xf32>, vector<64x128xf32> -> vector<64x128xf32>
    %17 = arith.addf %14, %16 : vector<64x128xf32>
    %cst_6 = arith.constant 0.000000e+00 : f32
    %18 = vector.broadcast %cst_6 : f32 to vector<64x128xf32>
    %19 = arith.maximumf %17, %18 : vector<64x128xf32>
    %c0_7 = arith.constant 0 : index
    %c0_8 = arith.constant 0 : index
    %20 = vector.load %arg4[%c0_7, %c0_8] : memref<32x64xf32, #tpu.memory_space<vmem>>, vector<32x64xf32>
    %c0_9 = arith.constant 0 : index
    %c0_10 = arith.constant 0 : index
    %21 = vector.load %arg5[%c0_9, %c0_10] : memref<32x1xf32, #tpu.memory_space<vmem>>, vector<32x1xf32>
    %cst_11 = arith.constant dense<0.000000e+00> : vector<32x128xf32>
    %22 = tpu.matmul %20, %19, %cst_11 {dimension_numbers = #tpu.dot_dimension_numbers<[1], [0], [0], [1], [0, 0, 1, 1], [], []>} : vector<32x64xf32>, vector<64x128xf32>, vector<32x128xf32> -> vector<32x128xf32>
    %23 = vector.broadcast %21 : vector<32x1xf32> to vector<32x128xf32>
    %24 = arith.addf %22, %23 : vector<32x128xf32>
    %cst_12 = arith.constant 0.000000e+00 : f32
    %25 = vector.broadcast %cst_12 : f32 to vector<32x128xf32>
    %26 = arith.maximumf %24, %25 : vector<32x128xf32>
    %c0_13 = arith.constant 0 : index
    %c0_14 = arith.constant 0 : index
    %27 = vector.load %arg6[%c0_13, %c0_14] : memref<16x32xf32, #tpu.memory_space<vmem>>, vector<16x32xf32>
    %c0_15 = arith.constant 0 : index
    %c0_16 = arith.constant 0 : index
    %28 = vector.load %arg7[%c0_15, %c0_16] : memref<16x1xf32, #tpu.memory_space<vmem>>, vector<16x1xf32>
    %cst_17 = arith.constant dense<0.000000e+00> : vector<16x128xf32>
    %29 = tpu.matmul %27, %26, %cst_17 {dimension_numbers = #tpu.dot_dimension_numbers<[1], [0], [0], [1], [0, 0, 1, 1], [], []>} : vector<16x32xf32>, vector<32x128xf32>, vector<16x128xf32> -> vector<16x128xf32>
    %30 = vector.broadcast %28 : vector<16x1xf32> to vector<16x128xf32>
    %31 = arith.addf %29, %30 : vector<16x128xf32>
    %cst_18 = arith.constant 0.000000e+00 : f32
    %32 = vector.broadcast %cst_18 : f32 to vector<16x128xf32>
    %33 = arith.maximumf %31, %32 : vector<16x128xf32>
    %c0_19 = arith.constant 0 : index
    %c0_20 = arith.constant 0 : index
    %34 = vector.load %arg8[%c0_19, %c0_20] : memref<1x16xf32, #tpu.memory_space<vmem>>, vector<1x16xf32>
    %c0_21 = arith.constant 0 : index
    %c0_22 = arith.constant 0 : index
    %35 = vector.load %arg9[%c0_21, %c0_22] : memref<1x1xf32, #tpu.memory_space<vmem>>, vector<1x1xf32>
    %cst_23 = arith.constant dense<0.000000e+00> : vector<1x128xf32>
    %36 = tpu.matmul %34, %33, %cst_23 {dimension_numbers = #tpu.dot_dimension_numbers<[1], [0], [0], [1], [0, 0, 1, 1], [], []>} : vector<1x16xf32>, vector<16x128xf32>, vector<1x128xf32> -> vector<1x128xf32>
    %37 = vector.broadcast %35 : vector<1x1xf32> to vector<1x128xf32>
    %38 = arith.addf %36, %37 : vector<1x128xf32>
    %39 = arith.negf %38 : vector<1x128xf32>
    %40 = math.exp %39 : vector<1x128xf32>
    %cst_24 = arith.constant 1.000000e+00 : f32
    %41 = vector.broadcast %cst_24 : f32 to vector<1x128xf32>
    %42 = arith.addf %41, %40 : vector<1x128xf32>
    %43 = arith.divf %41, %42 : vector<1x128xf32>
    %c0_25 = arith.constant 0 : index
    %c0_26 = arith.constant 0 : index
    %44 = vector.load %arg10[%c0_25, %c0_26] : memref<1x128xf32, #tpu.memory_space<vmem>>, vector<1x128xf32>
    tpu.vector_store %arg10[%c0_25, %c0_26], %43 {strides = array<i32>} : memref<1x128xf32, #tpu.memory_space<vmem>>, vector<1x128xf32>,
    return
  }
  func.func @transform_0(%arg0: i32) -> (i32, i32) {
    %c0_i32 = arith.constant 0 : i32
    %c0_i32_0 = arith.constant 0 : i32
    return %c0_i32, %arg0 : i32, i32
  }
  func.func @transform_1(%arg0: i32) -> (i32, i32) {
    %c0_i32 = arith.constant 0 : i32
    %c0_i32_0 = arith.constant 0 : i32
    %c0_i32_1 = arith.constant 0 : i32
    return %c0_i32, %c0_i32_0 : i32, i32
  }
  func.func @transform_2(%arg0: i32) -> (i32, i32) {
    %c0_i32 = arith.constant 0 : i32
    %c0_i32_0 = arith.constant 0 : i32
    %c0_i32_1 = arith.constant 0 : i32
    return %c0_i32, %c0_i32_0 : i32, i32
  }
  func.func @transform_3(%arg0: i32) -> (i32, i32) {
    %c0_i32 = arith.constant 0 : i32
    %c0_i32_0 = arith.constant 0 : i32
    %c0_i32_1 = arith.constant 0 : i32
    return %c0_i32, %c0_i32_0 : i32, i32
  }
  func.func @transform_4(%arg0: i32) -> (i32, i32) {
    %c0_i32 = arith.constant 0 : i32
    %c0_i32_0 = arith.constant 0 : i32
    %c0_i32_1 = arith.constant 0 : i32
    return %c0_i32, %c0_i32_0 : i32, i32
  }
  func.func @transform_5(%arg0: i32) -> (i32, i32) {
    %c0_i32 = arith.constant 0 : i32
    %c0_i32_0 = arith.constant 0 : i32
    %c0_i32_1 = arith.constant 0 : i32
    return %c0_i32, %c0_i32_0 : i32, i32
  }
  func.func @transform_6(%arg0: i32) -> (i32, i32) {
    %c0_i32 = arith.constant 0 : i32
    %c0_i32_0 = arith.constant 0 : i32
    %c0_i32_1 = arith.constant 0 : i32
    return %c0_i32, %c0_i32_0 : i32, i32
  }
  func.func @transform_7(%arg0: i32) -> (i32, i32) {
    %c0_i32 = arith.constant 0 : i32
    %c0_i32_0 = arith.constant 0 : i32
    %c0_i32_1 = arith.constant 0 : i32
    return %c0_i32, %c0_i32_0 : i32, i32
  }
  func.func @transform_8(%arg0: i32) -> (i32, i32) {
    %c0_i32 = arith.constant 0 : i32
    %c0_i32_0 = arith.constant 0 : i32
    %c0_i32_1 = arith.constant 0 : i32
    return %c0_i32, %c0_i32_0 : i32, i32
  }
  func.func @transform_9(%arg0: i32) -> (i32, i32) {
    %c0_i32 = arith.constant 0 : i32
    %c0_i32_0 = arith.constant 0 : i32
    return %c0_i32, %arg0 : i32, i32
  }
}

</mosaic_0001>

<llo_original>
// kernel: tpu_custom_call.1
$region0: #{tpu_custom_call.1}
  #allocation0 [shape = 'u32[]', space=smem, size = 0x4, offset = 0x4, fixed_abs, tag = 'smem constant byte address 0x4 - core index']
  #allocation1 [shape = 'u32[144,128]{1,0:T(1,128)}', space=vmem, size = 0x12000, scoped, tag = 'internal scratch']
  #allocation2 [shape = 'f32[1,1]{1,0:T(1,128)S(1)}', space=vmem, size = 0x200, scoped, tag = 'scoped memory for tpu_custom_call.1']
  %s0 = inlined_call_operand.vmem [shape: s32[2,128], index: 0, kind: input, shape index: {}]
  %s1 = inlined_call_operand.vmem [shape: f32[64,16], index: 1, kind: input, shape index: {}]
  %s2 = inlined_call_operand.vmem [shape: f32[64,24], index: 2, kind: input, shape index: {}]
  %s3 = inlined_call_operand.vmem [shape: f32[32,64], index: 3, kind: input, shape index: {}]
  %s4 = inlined_call_operand.vmem [shape: f32[32,1], index: 4, kind: input, shape index: {}]
  %s5 = inlined_call_operand.vmem [shape: f32[16,32], index: 5, kind: input, shape index: {}]
  %s6 = inlined_call_operand.vmem [shape: f32[16,1], index: 6, kind: input, shape index: {}]
  %s7 = inlined_call_operand.vmem [shape: f32[1,16], index: 7, kind: input, shape index: {}]
  %s8 = inlined_call_operand.<no memory space> [shape: f32[1,1], index: 8, kind: input, shape index: {}]
  %s9 = inlined_call_operand.hbm [shape: f32[1,128], index: 9, kind: output, shape index: {}]
  %s10 = sld [smem:[#allocation0]]
  $region46: #{tpu_custom_call.1} parent=0
    _
  %s12 = ssub.s32 1, %s10
  %s13 = scalar_select 0, %s12, %s10
  %v14 = vstv %s8
  %15 = vst [vmem:[#allocation2] sm:$0x1] %v14
  $region1: #{tpu_custom_call.1} parent=0
    #allocation3 [shape = 'u8[512]{0}', space=vmem, size = 0x400, scoped, tag = 'output window, operand 0, single buffered']
    #allocation4 [shape = 's32[1]{0}', space=sflag, size = 0x4, scoped, tag = 'scoped memory for tpu_custom_call.1']
    %16 = vsyncpa [#allocation4], 0
    // Predicated region
    $region2: #{tpu_custom_call.1} parent=1 // pred_check
      _
    $region3: #{tpu_custom_call.1} parent=1 // pred_check_branch
      %18 = sbr.rel (0) target = $region5
    $region4: #{tpu_custom_call.1} parent=1 // pred_region
      _
    $region5: #{tpu_custom_call.1} parent=1 // pred_fallthru
      _
    // Predicated region
    $region6: #{tpu_custom_call.1} parent=1 // pred_check
      _
    $region7: #{tpu_custom_call.1} parent=1 // pred_check_branch
      %20 = sbr.rel (0) target = $region9
    $region8: #{tpu_custom_call.1} parent=1 // pred_region
      _
    $region9: #{tpu_custom_call.1} parent=1 // pred_fallthru
      _
    // Predicated region
    $region10: #{tpu_custom_call.1} parent=1 // pred_check
      _
    $region11: #{tpu_custom_call.1} parent=1 // pred_check_branch
      %22 = sbr.rel (0) target = $region13
    $region12: #{tpu_custom_call.1} parent=1 // pred_region
      _
    $region13: #{tpu_custom_call.1} parent=1 // pred_fallthru
      _
    // Predicated region
    $region14: #{tpu_custom_call.1} parent=1 // pred_check
      _
    $region15: #{tpu_custom_call.1} parent=1 // pred_check_branch
      %24 = sbr.rel (0) target = $region17
    $region16: #{tpu_custom_call.1} parent=1 // pred_region
      _
    $region17: #{tpu_custom_call.1} parent=1 // pred_fallthru
      _
    // Predicated region
    $region18: #{tpu_custom_call.1} parent=1 // pred_check
      _
    $region19: #{tpu_custom_call.1} parent=1 // pred_check_branch
      %26 = sbr.rel (0) target = $region21
    $region20: #{tpu_custom_call.1} parent=1 // pred_region
      _
    $region21: #{tpu_custom_call.1} parent=1 // pred_fallthru
      _
    // Predicated region
    $region22: #{tpu_custom_call.1} parent=1 // pred_check
      _
    $region23: #{tpu_custom_call.1} parent=1 // pred_check_branch
      %28 = sbr.rel (0) target = $region25
    $region24: #{tpu_custom_call.1} parent=1 // pred_region
      _
    $region25: #{tpu_custom_call.1} parent=1 // pred_fallthru
      _
    // Predicated region
    $region26: #{tpu_custom_call.1} parent=1 // pred_check
      _
    $region27: #{tpu_custom_call.1} parent=1 // pred_check_branch
      %30 = sbr.rel (0) target = $region29
    $region28: #{tpu_custom_call.1} parent=1 // pred_region
      _
    $region29: #{tpu_custom_call.1} parent=1 // pred_fallthru
      _
    // Predicated region
    $region30: #{tpu_custom_call.1} parent=1 // pred_check
      _
    $region31: #{tpu_custom_call.1} parent=1 // pred_check_branch
      %32 = sbr.rel (0) target = $region33
    $region32: #{tpu_custom_call.1} parent=1 // pred_region
      _
    $region33: #{tpu_custom_call.1} parent=1 // pred_fallthru
      _
    // Predicated region
    $region34: #{tpu_custom_call.1} parent=1 // pred_check
      _
    $region35: #{tpu_custom_call.1} parent=1 // pred_check_branch
      %34 = sbr.rel (0) target = $region37
    $region36: #{tpu_custom_call.1} parent=1 // pred_region
      _
    $region37: #{tpu_custom_call.1} parent=1 // pred_fallthru
      _
    %v35 = vld [vmem:[%s0] sm:$0x3]
    %v36 = vlaneseq
    %v37 = vshrl.u32 %v36, 7
    %v38 = vadd.s32 %v37, 8
    %v39 = vadd.s32 %v37, 16
    %v40 = vlaneseq
    %v41 = vshrl.u32 %v40, 7
    %v42 = vsub.s32 0, %v41
    %v43 = vrot.slane %v35, %v42
    %vm44 = vcmp.eq.s32.totalorder %v37, %v43
    %vm45 = vcmp.eq.s32.totalorder %v38, %v43
    %v46 = vsel %vm44, 1, 0
    %v47 = vsel %vm45, 1, 0
    %v48 = vcvt.s32.f32 %v46
    %v49 = vcvt.s32.f32 %v47
    %v50 = vlaneseq
    %v51 = vshrl.u32 %v50, 7
    %v52 = vsub.s32 1, %v51
    %v53 = vrot.slane %v35, %v52
    %vm54 = vcmp.eq.s32.totalorder %v37, %v53
    %vm55 = vcmp.eq.s32.totalorder %v38, %v53
    %vm56 = vcmp.eq.s32.totalorder %v39, %v53
    %v57 = vsel %vm54, 1, 0
    %v58 = vsel %vm55, 1, 0
    %v59 = vsel %vm56, 1, 0
    %v60 = vcvt.s32.f32 %v57
    %v61 = vcvt.s32.f32 %v58
    %v62 = vcvt.s32.f32 %v59
    %v63 = vld [vmem:[%s1] sm:$0xff]
    %v64 = vld [vmem:[%s1 + $0x8] sm:$0xff]
    %v65 = vld [vmem:[%s1 + $0x10] sm:$0xff]
    %v66 = vld [vmem:[%s1 + $0x18] sm:$0xff]
    %v67 = vld [vmem:[%s1 + $0x20] sm:$0xff]
    %v68 = vld [vmem:[%s1 + $0x28] sm:$0xff]
    %v69 = vld [vmem:[%s1 + $0x30] sm:$0xff]
    %v70 = vld [vmem:[%s1 + $0x38] sm:$0xff]
    %v71 = vld [vmem:[%s2] sm:$0xff]
    %v72 = vld [vmem:[%s2 + $0x8] sm:$0xff]
    %v73 = vld [vmem:[%s2 + $0x10] sm:$0xff]
    %v74 = vld [vmem:[%s2 + $0x18] sm:$0xff]
    %v75 = vld [vmem:[%s2 + $0x20] sm:$0xff]
    %v76 = vld [vmem:[%s2 + $0x28] sm:$0xff]
    %v77 = vld [vmem:[%s2 + $0x30] sm:$0xff]
    %v78 = vld [vmem:[%s2 + $0x38] sm:$0xff]
    %vm79 = vcmask 195584
    %v81 = vsel %vm79, %v71, 0
    %v84 = vsel %vm79, %v72, 0
    %v87 = vsel %vm79, %v73, 0
    %v90 = vsel %vm79, %v74, 0
    %v93 = vsel %vm79, %v75, 0
    %v96 = vsel %vm79, %v76, 0
    %v99 = vsel %vm79, %v77, 0
    %v102 = vsel %vm79, %v78, 0
    %104 = vmatprep.subr.mxu0 0.0
    %105 = vmatpush1.msra.mxu0 0.0
    %106 = vmatprep.subr.mxu0 0.0
    %107 = vmatpush1.msra.mxu0 0.0
    %108 = vmatprep.subr.mxu0 0.0
    %109 = vmatpush1.msra.mxu0 0.0
    %110 = vmatprep.subr.mxu0 0.0
    %111 = vmatpush1.msra.mxu0 0.0
    %112 = vmatprep.subr.mxu0 0.0
    %113 = vmatpush1.msra.mxu0 0.0
    %114 = vmatprep.subr.mxu0 0.0
    %115 = vmatpush1.msra.mxu0 0.0
    %116 = vmatprep.subr.mxu0 0.0
    %117 = vmatpush1.msra.mxu0 0.0
    %118 = vmatprep.subr.mxu0 0.0
    %119 = vmatpush1.msra.mxu0 0.0
    %120 = vmatprep.subr.mxu0 0.0
    %121 = vmatpush1.msra.mxu0 0.0
    %122 = vmatprep.subr.mxu0 0.0
    %123 = vmatpush1.msra.mxu0 0.0
    %124 = vmatprep.subr.mxu0 0.0
    %125 = vmatpush1.msra.mxu0 0.0
    %126 = vmatprep.subr.mxu0 0.0
    %127 = vmatpush1.msra.mxu0 0.0
    %128 = vmatprep.subr.mxu0 0.0
    %129 = vmatpush1.msra.mxu0 0.0
    %130 = vmatprep.subr.mxu0 0.0
    %131 = vmatpush1.msra.mxu0 %v62
    %132 = vmatprep.subr.mxu0 0.0
    %133 = vmatpush1.msra.mxu0 %v61
    %134 = vmatprep.subr.mxu0 0.0
    %135 = vmatpush1.msra.mxu0 %v60
    %136 = vmatprep.subr.mxu0 0.0
    %137 = vmatpush2.msra.mxu0 0.0
    %138 = vmatprep.subr.mxu0 0.0
    %139 = vmatpush2.msra.mxu0 0.0
    %140 = vmatprep.subr.mxu0 0.0
    %141 = vmatpush2.msra.mxu0 0.0
    %142 = vmatprep.subr.mxu0 0.0
    %143 = vmatpush2.msra.mxu0 0.0
    %144 = vmatprep.subr.mxu0 0.0
    %145 = vmatpush2.msra.mxu0 0.0
    %146 = vmatprep.subr.mxu0 0.0
    %147 = vmatpush2.msra.mxu0 0.0
    %148 = vmatprep.subr.mxu0 0.0
    %149 = vmatpush2.msra.mxu0 0.0
    %150 = vmatprep.subr.mxu0 0.0
    %151 = vmatpush2.msra.mxu0 0.0
    %152 = vmatprep.subr.mxu0 0.0
    %153 = vmatpush2.msra.mxu0 0.0
    %154 = vmatprep.subr.mxu0 0.0
    %155 = vmatpush2.msra.mxu0 0.0
    %156 = vmatprep.subr.mxu0 0.0
    %157 = vmatpush2.msra.mxu0 0.0
    %158 = vmatprep.subr.mxu0 0.0
    %159 = vmatpush2.msra.mxu0 0.0
    %160 = vmatprep.subr.mxu0 0.0
    %161 = vmatpush2.msra.mxu0 0.0
    %162 = vmatprep.subr.mxu0 0.0
    %163 = vmatpush2.msra.mxu0 0.0
    %164 = vmatprep.subr.mxu0 0.0
    %165 = vmatpush2.msra.mxu0 0.0
    %166 = vmatprep.subr.mxu0 0.0
    %167 = vmatpush2.msra.mxu0 0.0
    %168 = vmatprep.mubr.f32.mxu0 0.0
    %169 = vmatmul.mubr.f32.gmra.mxu0 %v81
    %v170 = vpop.f32.mrf.mxu0
    %v171 = vadd.f32 0.0, %v170
    %v172 = vpop.f32.mrf.mxu0
    %173 = vmatprep.mubr.f32.mxu0 0.0
    %174 = vmatmul.mubr.f32.gmra.mxu0 %v84
    %v175 = vpop.f32.mrf.mxu0
    %v176 = vadd.f32 0.0, %v175
    %v177 = vpop.f32.mrf.mxu0
    %178 = vmatprep.mubr.f32.mxu0 0.0
    %179 = vmatmul.mubr.f32.gmra.mxu0 %v87
    %v180 = vpop.f32.mrf.mxu0
    %v181 = vadd.f32 0.0, %v180
    %v182 = vpop.f32.mrf.mxu0
    %183 = vmatprep.mubr.f32.mxu0 0.0
    %184 = vmatmul.mubr.f32.gmra.mxu0 %v90
    %v185 = vpop.f32.mrf.mxu0
    %v186 = vadd.f32 0.0, %v185
    %v187 = vpop.f32.mrf.mxu0
    %188 = vmatprep.mubr.f32.mxu0 0.0
    %189 = vmatmul.mubr.f32.gmra.mxu0 %v93
    %v190 = vpop.f32.mrf.mxu0
    %v191 = vadd.f32 0.0, %v190
    %v192 = vpop.f32.mrf.mxu0
    %193 = vmatprep.mubr.f32.mxu0 0.0
    %194 = vmatmul.mubr.f32.gmra.mxu0 %v96
    %v195 = vpop.f32.mrf.mxu0
    %v196 = vadd.f32 0.0, %v195
    %v197 = vpop.f32.mrf.mxu0
    %198 = vmatprep.mubr.f32.mxu0 0.0
    %199 = vmatmul.mubr.f32.gmra.mxu0 %v99
    %v200 = vpop.f32.mrf.mxu0
    %v201 = vadd.f32 0.0, %v200
    %v202 = vpop.f32.mrf.mxu0
    %203 = vmatprep.mubr.f32.mxu0 0.0
    %204 = vmatmul.mubr.f32.gmra.mxu0 %v102
    %v205 = vpop.f32.mrf.mxu0
    %v206 = vadd.f32 0.0, %v205
    %v207 = vpop.f32.mrf.mxu0
    %208 = vdwg.mxu0
    %vm209 = vcmask 130048
    %v211 = vsel %vm209, %v63, 0
    %v214 = vsel %vm209, %v64, 0
    %v217 = vsel %vm209, %v65, 0
    %v220 = vsel %vm209, %v66, 0
    %v223 = vsel %vm209, %v67, 0
    %v226 = vsel %vm209, %v68, 0
    %v229 = vsel %vm209, %v69, 0
    %v232 = vsel %vm209, %v70, 0
    %234 = vmatprep.subr.mxu0 0.0
    %235 = vmatpush1.msra.mxu0 0.0
    %236 = vmatprep.subr.mxu0 0.0
    %237 = vmatpush1.msra.mxu0 0.0
    %238 = vmatprep.subr.mxu0 0.0
    %239 = vmatpush1.msra.mxu0 0.0
    %240 = vmatprep.subr.mxu0 0.0
    %241 = vmatpush1.msra.mxu0 0.0
    %242 = vmatprep.subr.mxu0 0.0
    %243 = vmatpush1.msra.mxu0 0.0
    %244 = vmatprep.subr.mxu0 0.0
    %245 = vmatpush1.msra.mxu0 0.0
    %246 = vmatprep.subr.mxu0 0.0
    %247 = vmatpush1.msra.mxu0 0.0
    %248 = vmatprep.subr.mxu0 0.0
    %249 = vmatpush1.msra.mxu0 0.0
    %250 = vmatprep.subr.mxu0 0.0
    %251 = vmatpush1.msra.mxu0 0.0
    %252 = vmatprep.subr.mxu0 0.0
    %253 = vmatpush1.msra.mxu0 0.0
    %254 = vmatprep.subr.mxu0 0.0
    %255 = vmatpush1.msra.mxu0 0.0
    %256 = vmatprep.subr.mxu0 0.0
    %257 = vmatpush1.msra.mxu0 0.0
    %258 = vmatprep.subr.mxu0 0.0
    %259 = vmatpush1.msra.mxu0 0.0
    %260 = vmatprep.subr.mxu0 0.0
    %261 = vmatpush1.msra.mxu0 0.0
    %262 = vmatprep.subr.mxu0 0.0
    %263 = vmatpush1.msra.mxu0 %v49
    %264 = vmatprep.subr.mxu0 0.0
    %265 = vmatpush1.msra.mxu0 %v48
    %266 = vmatprep.subr.mxu0 0.0
    %267 = vmatpush2.msra.mxu0 0.0
    %268 = vmatprep.subr.mxu0 0.0
    %269 = vmatpush2.msra.mxu0 0.0
    %270 = vmatprep.subr.mxu0 0.0
    %271 = vmatpush2.msra.mxu0 0.0
    %272 = vmatprep.subr.mxu0 0.0
    %273 = vmatpush2.msra.mxu0 0.0
    %274 = vmatprep.subr.mxu0 0.0
    %275 = vmatpush2.msra.mxu0 0.0
    %276 = vmatprep.subr.mxu0 0.0
    %277 = vmatpush2.msra.mxu0 0.0
    %278 = vmatprep.subr.mxu0 0.0
    %279 = vmatpush2.msra.mxu0 0.0
    %280 = vmatprep.subr.mxu0 0.0
    %281 = vmatpush2.msra.mxu0 0.0
    %282 = vmatprep.subr.mxu0 0.0
    %283 = vmatpush2.msra.mxu0 0.0
    %284 = vmatprep.subr.mxu0 0.0
    %285 = vmatpush2.msra.mxu0 0.0
    %286 = vmatprep.subr.mxu0 0.0
    %287 = vmatpush2.msra.mxu0 0.0
    %288 = vmatprep.subr.mxu0 0.0
    %289 = vmatpush2.msra.mxu0 0.0
    %290 = vmatprep.subr.mxu0 0.0
    %291 = vmatpush2.msra.mxu0 0.0
    %292 = vmatprep.subr.mxu0 0.0
    %293 = vmatpush2.msra.mxu0 0.0
    %294 = vmatprep.subr.mxu0 0.0
    %295 = vmatpush2.msra.mxu0 0.0
    %296 = vmatprep.subr.mxu0 0.0
    %297 = vmatpush2.msra.mxu0 0.0
    %298 = vmatprep.mubr.f32.mxu0 0.0
    %299 = vmatmul.mubr.f32.gmra.mxu0 %v211
    %v300 = vpop.f32.mrf.mxu0
    %v301 = vadd.f32 %v171, %v300
    %v302 = vpop.f32.mrf.mxu0
    %303 = vmatprep.mubr.f32.mxu0 0.0
    %304 = vmatmul.mubr.f32.gmra.mxu0 %v214
    %v305 = vpop.f32.mrf.mxu0
    %v306 = vadd.f32 %v176, %v305
    %v307 = vpop.f32.mrf.mxu0
    %308 = vmatprep.mubr.f32.mxu0 0.0
    %309 = vmatmul.mubr.f32.gmra.mxu0 %v217
    %v310 = vpop.f32.mrf.mxu0
    %v311 = vadd.f32 %v181, %v310
    %v312 = vpop.f32.mrf.mxu0
    %313 = vmatprep.mubr.f32.mxu0 0.0
    %314 = vmatmul.mubr.f32.gmra.mxu0 %v220
    %v315 = vpop.f32.mrf.mxu0
    %v316 = vadd.f32 %v186, %v315
    %v317 = vpop.f32.mrf.mxu0
    %318 = vmatprep.mubr.f32.mxu0 0.0
    %319 = vmatmul.mubr.f32.gmra.mxu0 %v223
    %v320 = vpop.f32.mrf.mxu0
    %v321 = vadd.f32 %v191, %v320
    %v322 = vpop.f32.mrf.mxu0
    %323 = vmatprep.mubr.f32.mxu0 0.0
    %324 = vmatmul.mubr.f32.gmra.mxu0 %v226
    %v325 = vpop.f32.mrf.mxu0
    %v326 = vadd.f32 %v196, %v325
    %v327 = vpop.f32.mrf.mxu0
    %328 = vmatprep.mubr.f32.mxu0 0.0
    %329 = vmatmul.mubr.f32.gmra.mxu0 %v229
    %v330 = vpop.f32.mrf.mxu0
    %v331 = vadd.f32 %v201, %v330
    %v332 = vpop.f32.mrf.mxu0
    %333 = vmatprep.mubr.f32.mxu0 0.0
    %334 = vmatmul.mubr.f32.gmra.mxu0 %v232
    %v335 = vpop.f32.mrf.mxu0
    %v336 = vadd.f32 %v206, %v335
    %v337 = vpop.f32.mrf.mxu0
    %338 = vdwg.mxu0
    %v339 = vmax.f32 %v301, 0.0
    %v340 = vmax.f32 %v306, 0.0
    %v341 = vmax.f32 %v311, 0.0
    %v342 = vmax.f32 %v316, 0.0
    %v343 = vmax.f32 %v321, 0.0
    %v344 = vmax.f32 %v326, 0.0
    %v345 = vmax.f32 %v331, 0.0
    %v346 = vmax.f32 %v336, 0.0
    %v347 = vld [vmem:[%s3] sm:$0xff]
    %v348 = vld [vmem:[%s3 + $0x8] sm:$0xff]
    %v349 = vld [vmem:[%s3 + $0x10] sm:$0xff]
    %v350 = vld [vmem:[%s3 + $0x18] sm:$0xff]
    %v351 = vld [vmem:[%s4] sm:$0xff]
    %v352 = vld [vmem:[%s4 + $0x8] sm:$0xff]
    %v353 = vld [vmem:[%s4 + $0x10] sm:$0xff]
    %v354 = vld [vmem:[%s4 + $0x18] sm:$0xff]
    %356 = vset.pattern.permute.xlu0 0
    %357 = vperm.xlu0 %356, %v351
    %v358 = vpop.permute.xlu0 %357
    %361 = vset.pattern.permute.xlu0 0
    %362 = vperm.xlu0 %361, %v352
    %v363 = vpop.permute.xlu0 %362
    %366 = vset.pattern.permute.xlu0 0
    %367 = vperm.xlu0 %366, %v353
    %v368 = vpop.permute.xlu0 %367
    %371 = vset.pattern.permute.xlu0 0
    %372 = vperm.xlu0 %371, %v354
    %v373 = vpop.permute.xlu0 %372
    %vm375 = vcmask 523264
    %v377 = vsel %vm375, %v347, 0
    %v380 = vsel %vm375, %v348, 0
    %v383 = vsel %vm375, %v349, 0
    %v386 = vsel %vm375, %v350, 0
    %388 = vmatprep.subr.mxu0 0.0
    %389 = vmatpush1.msra.mxu0 0.0
    %390 = vmatprep.subr.mxu0 0.0
    %391 = vmatpush1.msra.mxu0 0.0
    %392 = vmatprep.subr.mxu0 0.0
    %393 = vmatpush1.msra.mxu0 0.0
    %394 = vmatprep.subr.mxu0 0.0
    %395 = vmatpush1.msra.mxu0 0.0
    %396 = vmatprep.subr.mxu0 0.0
    %397 = vmatpush1.msra.mxu0 0.0
    %398 = vmatprep.subr.mxu0 0.0
    %399 = vmatpush1.msra.mxu0 0.0
    %400 = vmatprep.subr.mxu0 0.0
    %401 = vmatpush1.msra.mxu0 0.0
    %402 = vmatprep.subr.mxu0 0.0
    %403 = vmatpush1.msra.mxu0 0.0
    %404 = vmatprep.subr.mxu0 0.0
    %405 = vmatpush1.msra.mxu0 %v346
    %406 = vmatprep.subr.mxu0 0.0
    %407 = vmatpush1.msra.mxu0 %v345
    %408 = vmatprep.subr.mxu0 0.0
    %409 = vmatpush1.msra.mxu0 %v344
    %410 = vmatprep.subr.mxu0 0.0
    %411 = vmatpush1.msra.mxu0 %v343
    %412 = vmatprep.subr.mxu0 0.0
    %413 = vmatpush1.msra.mxu0 %v342
    %414 = vmatprep.subr.mxu0 0.0
    %415 = vmatpush1.msra.mxu0 %v341
    %416 = vmatprep.subr.mxu0 0.0
    %417 = vmatpush1.msra.mxu0 %v340
    %418 = vmatprep.subr.mxu0 0.0
    %419 = vmatpush1.msra.mxu0 %v339
    %420 = vmatprep.subr.mxu0 0.0
    %421 = vmatpush2.msra.mxu0 0.0
    %422 = vmatprep.subr.mxu0 0.0
    %423 = vmatpush2.msra.mxu0 0.0
    %424 = vmatprep.subr.mxu0 0.0
    %425 = vmatpush2.msra.mxu0 0.0
    %426 = vmatprep.subr.mxu0 0.0
    %427 = vmatpush2.msra.mxu0 0.0
    %428 = vmatprep.subr.mxu0 0.0
    %429 = vmatpush2.msra.mxu0 0.0
    %430 = vmatprep.subr.mxu0 0.0
    %431 = vmatpush2.msra.mxu0 0.0
    %432 = vmatprep.subr.mxu0 0.0
    %433 = vmatpush2.msra.mxu0 0.0
    %434 = vmatprep.subr.mxu0 0.0
    %435 = vmatpush2.msra.mxu0 0.0
    %436 = vmatprep.subr.mxu0 0.0
    %437 = vmatpush2.msra.mxu0 0.0
    %438 = vmatprep.subr.mxu0 0.0
    %439 = vmatpush2.msra.mxu0 0.0
    %440 = vmatprep.subr.mxu0 0.0
    %441 = vmatpush2.msra.mxu0 0.0
    %442 = vmatprep.subr.mxu0 0.0
    %443 = vmatpush2.msra.mxu0 0.0
    %444 = vmatprep.subr.mxu0 0.0
    %445 = vmatpush2.msra.mxu0 0.0
    %446 = vmatprep.subr.mxu0 0.0
    %447 = vmatpush2.msra.mxu0 0.0
    %448 = vmatprep.subr.mxu0 0.0
    %449 = vmatpush2.msra.mxu0 0.0
    %450 = vmatprep.subr.mxu0 0.0
    %451 = vmatpush2.msra.mxu0 0.0
    %452 = vmatprep.mubr.f32.mxu0 0.0
    %453 = vmatmul.mubr.f32.gmra.mxu0 %v377
    %v454 = vpop.f32.mrf.mxu0
    %v455 = vadd.f32 %v358, %v454
    %v456 = vpop.f32.mrf.mxu0
    %457 = vmatprep.mubr.f32.mxu0 0.0
    %458 = vmatmul.mubr.f32.gmra.mxu0 %v380
    %v459 = vpop.f32.mrf.mxu0
    %v460 = vadd.f32 %v363, %v459
    %v461 = vpop.f32.mrf.mxu0
    %462 = vmatprep.mubr.f32.mxu0 0.0
    %463 = vmatmul.mubr.f32.gmra.mxu0 %v383
    %v464 = vpop.f32.mrf.mxu0
    %v465 = vadd.f32 %v368, %v464
    %v466 = vpop.f32.mrf.mxu0
    %467 = vmatprep.mubr.f32.mxu0 0.0
    %468 = vmatmul.mubr.f32.gmra.mxu0 %v386
    %v469 = vpop.f32.mrf.mxu0
    %v470 = vadd.f32 %v373, %v469
    %v471 = vpop.f32.mrf.mxu0
    %472 = vdwg.mxu0
    %v473 = vmax.f32 %v455, 0.0
    %v474 = vmax.f32 %v460, 0.0
    %v475 = vmax.f32 %v465, 0.0
    %v476 = vmax.f32 %v470, 0.0
    %v477 = vld [vmem:[%s5] sm:$0xff]
    %v478 = vld [vmem:[%s5 + $0x8] sm:$0xff]
    %v479 = vld [vmem:[%s6] sm:$0xff]
    %v480 = vld [vmem:[%s6 + $0x8] sm:$0xff]
    %482 = vset.pattern.permute.xlu0 0
    %483 = vperm.xlu0 %482, %v479
    %v484 = vpop.permute.xlu0 %483
    %487 = vset.pattern.permute.xlu0 0
    %488 = vperm.xlu0 %487, %v480
    %v489 = vpop.permute.xlu0 %488
    %vm491 = vcmask 261120
    %v493 = vsel %vm491, %v477, 0
    %v496 = vsel %vm491, %v478, 0
    %498 = vmatprep.subr.mxu0 0.0
    %499 = vmatpush1.msra.mxu0 0.0
    %500 = vmatprep.subr.mxu0 0.0
    %501 = vmatpush1.msra.mxu0 0.0
    %502 = vmatprep.subr.mxu0 0.0
    %503 = vmatpush1.msra.mxu0 0.0
    %504 = vmatprep.subr.mxu0 0.0
    %505 = vmatpush1.msra.mxu0 0.0
    %506 = vmatprep.subr.mxu0 0.0
    %507 = vmatpush1.msra.mxu0 0.0
    %508 = vmatprep.subr.mxu0 0.0
    %509 = vmatpush1.msra.mxu0 0.0
    %510 = vmatprep.subr.mxu0 0.0
    %511 = vmatpush1.msra.mxu0 0.0
    %512 = vmatprep.subr.mxu0 0.0
    %513 = vmatpush1.msra.mxu0 0.0
    %514 = vmatprep.subr.mxu0 0.0
    %515 = vmatpush1.msra.mxu0 0.0
    %516 = vmatprep.subr.mxu0 0.0
    %517 = vmatpush1.msra.mxu0 0.0
    %518 = vmatprep.subr.mxu0 0.0
    %519 = vmatpush1.msra.mxu0 0.0
    %520 = vmatprep.subr.mxu0 0.0
    %521 = vmatpush1.msra.mxu0 0.0
    %522 = vmatprep.subr.mxu0 0.0
    %523 = vmatpush1.msra.mxu0 %v476
    %524 = vmatprep.subr.mxu0 0.0
    %525 = vmatpush1.msra.mxu0 %v475
    %526 = vmatprep.subr.mxu0 0.0
    %527 = vmatpush1.msra.mxu0 %v474
    %528 = vmatprep.subr.mxu0 0.0
    %529 = vmatpush1.msra.mxu0 %v473
    %530 = vmatprep.subr.mxu0 0.0
    %531 = vmatpush2.msra.mxu0 0.0
    %532 = vmatprep.subr.mxu0 0.0
    %533 = vmatpush2.msra.mxu0 0.0
    %534 = vmatprep.subr.mxu0 0.0
    %535 = vmatpush2.msra.mxu0 0.0
    %536 = vmatprep.subr.mxu0 0.0
    %537 = vmatpush2.msra.mxu0 0.0
    %538 = vmatprep.subr.mxu0 0.0
    %539 = vmatpush2.msra.mxu0 0.0
    %540 = vmatprep.subr.mxu0 0.0
    %541 = vmatpush2.msra.mxu0 0.0
    %542 = vmatprep.subr.mxu0 0.0
    %543 = vmatpush2.msra.mxu0 0.0
    %544 = vmatprep.subr.mxu0 0.0
    %545 = vmatpush2.msra.mxu0 0.0
    %546 = vmatprep.subr.mxu0 0.0
    %547 = vmatpush2.msra.mxu0 0.0
    %548 = vmatprep.subr.mxu0 0.0
    %549 = vmatpush2.msra.mxu0 0.0
    %550 = vmatprep.subr.mxu0 0.0
    %551 = vmatpush2.msra.mxu0 0.0
    %552 = vmatprep.subr.mxu0 0.0
    %553 = vmatpush2.msra.mxu0 0.0
    %554 = vmatprep.subr.mxu0 0.0
    %555 = vmatpush2.msra.mxu0 0.0
    %556 = vmatprep.subr.mxu0 0.0
    %557 = vmatpush2.msra.mxu0 0.0
    %558 = vmatprep.subr.mxu0 0.0
    %559 = vmatpush2.msra.mxu0 0.0
    %560 = vmatprep.subr.mxu0 0.0
    %561 = vmatpush2.msra.mxu0 0.0
    %562 = vmatprep.mubr.f32.mxu0 0.0
    %563 = vmatmul.mubr.f32.gmra.mxu0 %v493
    %v564 = vpop.f32.mrf.mxu0
    %v565 = vadd.f32 %v484, %v564
    %v566 = vpop.f32.mrf.mxu0
    %567 = vmatprep.mubr.f32.mxu0 0.0
    %568 = vmatmul.mubr.f32.gmra.mxu0 %v496
    %v569 = vpop.f32.mrf.mxu0
    %v570 = vadd.f32 %v489, %v569
    %v571 = vpop.f32.mrf.mxu0
    %572 = vdwg.mxu0
    %v573 = vmax.f32 %v565, 0.0
    %v574 = vmax.f32 %v570, 0.0
    %v575 = vld [vmem:[%s7] sm:$0x1]
    %v576 = vld [vmem:[#allocation2] sm:$0x1]
    %578 = vset.pattern.permute.xlu0 0
    %579 = vperm.xlu0 %578, %v576
    %v580 = vpop.permute.xlu0 %579
    %v582 = vlaneseq
    %v583 = vshrl.u32 %v582, 7
    %v584 = vsub.s32 0, %v583
    %v585 = vrot.slane %v580, %v584
    %v587 = vsel %vm209, %v575, 0
    %589 = vmatprep.subr.mxu0 0.0
    %590 = vmatpush1.msra.mxu0 0.0
    %591 = vmatprep.subr.mxu0 0.0
    %592 = vmatpush1.msra.mxu0 0.0
    %593 = vmatprep.subr.mxu0 0.0
    %594 = vmatpush1.msra.mxu0 0.0
    %595 = vmatprep.subr.mxu0 0.0
    %596 = vmatpush1.msra.mxu0 0.0
    %597 = vmatprep.subr.mxu0 0.0
    %598 = vmatpush1.msra.mxu0 0.0
    %599 = vmatprep.subr.mxu0 0.0
    %600 = vmatpush1.msra.mxu0 0.0
    %601 = vmatprep.subr.mxu0 0.0
    %602 = vmatpush1.msra.mxu0 0.0
    %603 = vmatprep.subr.mxu0 0.0
    %604 = vmatpush1.msra.mxu0 0.0
    %605 = vmatprep.subr.mxu0 0.0
    %606 = vmatpush1.msra.mxu0 0.0
    %607 = vmatprep.subr.mxu0 0.0
    %608 = vmatpush1.msra.mxu0 0.0
    %609 = vmatprep.subr.mxu0 0.0
    %610 = vmatpush1.msra.mxu0 0.0
    %611 = vmatprep.subr.mxu0 0.0
    %612 = vmatpush1.msra.mxu0 0.0
    %613 = vmatprep.subr.mxu0 0.0
    %614 = vmatpush1.msra.mxu0 0.0
    %615 = vmatprep.subr.mxu0 0.0
    %616 = vmatpush1.msra.mxu0 0.0
    %617 = vmatprep.subr.mxu0 0.0
    %618 = vmatpush1.msra.mxu0 %v574
    %619 = vmatprep.subr.mxu0 0.0
    %620 = vmatpush1.msra.mxu0 %v573
    %621 = vmatprep.subr.mxu0 0.0
    %622 = vmatpush2.msra.mxu0 0.0
    %623 = vmatprep.subr.mxu0 0.0
    %624 = vmatpush2.msra.mxu0 0.0
    %625 = vmatprep.subr.mxu0 0.0
    %626 = vmatpush2.msra.mxu0 0.0
    %627 = vmatprep.subr.mxu0 0.0
    %628 = vmatpush2.msra.mxu0 0.0
    %629 = vmatprep.subr.mxu0 0.0
    %630 = vmatpush2.msra.mxu0 0.0
    %631 = vmatprep.subr.mxu0 0.0
    %632 = vmatpush2.msra.mxu0 0.0
    %633 = vmatprep.subr.mxu0 0.0
    %634 = vmatpush2.msra.mxu0 0.0
    %635 = vmatprep.subr.mxu0 0.0
    %636 = vmatpush2.msra.mxu0 0.0
    %637 = vmatprep.subr.mxu0 0.0
    %638 = vmatpush2.msra.mxu0 0.0
    %639 = vmatprep.subr.mxu0 0.0
    %640 = vmatpush2.msra.mxu0 0.0
    %641 = vmatprep.subr.mxu0 0.0
    %642 = vmatpush2.msra.mxu0 0.0
    %643 = vmatprep.subr.mxu0 0.0
    %644 = vmatpush2.msra.mxu0 0.0
    %645 = vmatprep.subr.mxu0 0.0
    %646 = vmatpush2.msra.mxu0 0.0
    %647 = vmatprep.subr.mxu0 0.0
    %648 = vmatpush2.msra.mxu0 0.0
    %649 = vmatprep.subr.mxu0 0.0
    %650 = vmatpush2.msra.mxu0 0.0
    %651 = vmatprep.subr.mxu0 0.0
    %652 = vmatpush2.msra.mxu0 0.0
    %653 = vmatprep.mubr.f32.mxu0 0.0
    %654 = vmatmul.mubr.f32.gmra.mxu0 %v587
    %v655 = vpop.f32.mrf.mxu0
    %v656 = vadd.f32 %v585, %v655
    %v657 = vpop.f32.mrf.mxu0
    %658 = vdwg.mxu0
    %v659 = vxor.u32 %v656, 2147483648
    %v660 = vmul.f32 %v659, 1.442695
    %v661 = vpow.pop %v660
    %v662 = vadd.f32 %v661, 1.0
    %v663 = vrcp.pop %v662
    %v664 = vmul.f32 1.0, %v663
    %665 = vst [vmem:[#allocation3] sm:$0x1] %v664
    // Predicated region
    $region38: #{tpu_custom_call.1} parent=1 // pred_check
      _
    $region39: #{tpu_custom_call.1} parent=1 // pred_check_branch
      %667 = sbr.rel (0) target = $region41
    $region40: #{tpu_custom_call.1} parent=1 // pred_region
      %s669 = ssub.s32 16, 16
      %670 = vsyncadd [#allocation4], %s669
      %s672 = sshll.u32 [#allocation3], 4
      %s673 = int_to_ptr.vmem [resolvable:$true] %s672
      %675 = dma.vmem_to_hbm [thread:$0]  %s673, 16, %s9, [#allocation4]
    $region41: #{tpu_custom_call.1} parent=1 // pred_fallthru
      _
    // Predicated region
    $region42: #{tpu_custom_call.1} parent=1 // pred_check
      _
    $region43: #{tpu_custom_call.1} parent=1 // pred_check_branch
      %677 = sbr.rel (0) target = $region45
    $region44: #{tpu_custom_call.1} parent=1 // pred_region
      %678 = dma.done [#allocation4], 16
    $region45: #{tpu_custom_call.1} parent=1 // pred_fallthru
      _
    %679 = vsyncpa [#allocation4], 1

// kernel: tpu_custom_call.1
$region0: #{tpu_custom_call.1}
  #allocation0 [shape = 'u32[]', space=smem, size = 0x4, offset = 0x4, fixed_abs, tag = 'smem constant byte address 0x4 - core index']
  #allocation1 [shape = 'u32[144,128]{1,0:T(1,128)}', space=vmem, size = 0x12000, scoped, tag = 'internal scratch']
  #allocation2 [shape = 'f32[1,1]{1,0:T(1,128)S(1)}', space=vmem, size = 0x200, scoped, tag = 'scoped memory for tpu_custom_call.1']
  %s0 = inlined_call_operand.vmem [shape: s32[2,128], index: 0, kind: input, shape index: {}]
  %s1 = inlined_call_operand.vmem [shape: f32[64,16], index: 1, kind: input, shape index: {}]
  %s2 = inlined_call_operand.vmem [shape: f32[64,24], index: 2, kind: input, shape index: {}]
  %s3 = inlined_call_operand.vmem [shape: f32[32,64], index: 3, kind: input, shape index: {}]
  %s4 = inlined_call_operand.vmem [shape: f32[32,1], index: 4, kind: input, shape index: {}]
  %s5 = inlined_call_operand.vmem [shape: f32[16,32], index: 5, kind: input, shape index: {}]
  %s6 = inlined_call_operand.vmem [shape: f32[16,1], index: 6, kind: input, shape index: {}]
  %s7 = inlined_call_operand.vmem [shape: f32[1,16], index: 7, kind: input, shape index: {}]
  %s8 = inlined_call_operand.<no memory space> [shape: f32[1,1], index: 8, kind: input, shape index: {}]
  %s9 = inlined_call_operand.hbm [shape: f32[1,128], index: 9, kind: output, shape index: {}]
  %s10 = sld [smem:[#allocation0]]
  $region46: #{tpu_custom_call.1} parent=0
    _
  %s12 = ssub.s32 1, %s10
  %s13 = scalar_select 0, %s12, %s10
  %v14 = vstv %s8
  %15 = vst [vmem:[#allocation2] sm:$0x1] %v14
  $region1: #{tpu_custom_call.1} parent=0
    #allocation3 [shape = 'u8[512]{0}', space=vmem, size = 0x400, scoped, tag = 'output window, operand 0, single buffered']
    #allocation4 [shape = 's32[1]{0}', space=sflag, size = 0x4, scoped, tag = 'scoped memory for tpu_custom_call.1']
    %16 = vsyncpa [#allocation4], 0
    // Predicated region
    $region2: #{tpu_custom_call.1} parent=1 // pred_check
      _
    $region3: #{tpu_custom_call.1} parent=1 // pred_check_branch
      %18 = sbr.rel (0) target = $region5
    $region4: #{tpu_custom_call.1} parent=1 // pred_region
      _
    $region5: #{tpu_custom_call.1} parent=1 // pred_fallthru
      _
    // Predicated region
    $region6: #{tpu_custom_call.1} parent=1 // pred_check
      _
    $region7: #{tpu_custom_call.1} parent=1 // pred_check_branch
      %20 = sbr.rel (0) target = $region9
    $region8: #{tpu_custom_call.1} parent=1 // pred_region
      _
    $region9: #{tpu_custom_call.1} parent=1 // pred_fallthru
      _
    // Predicated region
    $region10: #{tpu_custom_call.1} parent=1 // pred_check
      _
    $region11: #{tpu_custom_call.1} parent=1 // pred_check_branch
      %22 = sbr.rel (0) target = $region13
    $region12: #{tpu_custom_call.1} parent=1 // pred_region
      _
    $region13: #{tpu_custom_call.1} parent=1 // pred_fallthru
      _
    // Predicated region
    $region14: #{tpu_custom_call.1} parent=1 // pred_check
      _
    $region15: #{tpu_custom_call.1} parent=1 // pred_check_branch
      %24 = sbr.rel (0) target = $region17
    $region16: #{tpu_custom_call.1} parent=1 // pred_region
      _
    $region17: #{tpu_custom_call.1} parent=1 // pred_fallthru
      _
    // Predicated region
    $region18: #{tpu_custom_call.1} parent=1 // pred_check
      _
    $region19: #{tpu_custom_call.1} parent=1 // pred_check_branch
      %26 = sbr.rel (0) target = $region21
    $region20: #{tpu_custom_call.1} parent=1 // pred_region
      _
    $region21: #{tpu_custom_call.1} parent=1 // pred_fallthru
      _
    // Predicated region
    $region22: #{tpu_custom_call.1} parent=1 // pred_check
      _
    $region23: #{tpu_custom_call.1} parent=1 // pred_check_branch
      %28 = sbr.rel (0) target = $region25
    $region24: #{tpu_custom_call.1} parent=1 // pred_region
      _
    $region25: #{tpu_custom_call.1} parent=1 // pred_fallthru
      _
    // Predicated region
    $region26: #{tpu_custom_call.1} parent=1 // pred_check
      _
    $region27: #{tpu_custom_call.1} parent=1 // pred_check_branch
      %30 = sbr.rel (0) target = $region29
    $region28: #{tpu_custom_call.1} parent=1 // pred_region
      _
    $region29: #{tpu_custom_call.1} parent=1 // pred_fallthru
      _
    // Predicated region
    $region30: #{tpu_custom_call.1} parent=1 // pred_check
      _
    $region31: #{tpu_custom_call.1} parent=1 // pred_check_branch
      %32 = sbr.rel (0) target = $region33
    $region32: #{tpu_custom_call.1} parent=1 // pred_region
      _
    $region33: #{tpu_custom_call.1} parent=1 // pred_fallthru
      _
    // Predicated region
    $region34: #{tpu_custom_call.1} parent=1 // pred_check
      _
    $region35: #{tpu_custom_call.1} parent=1 // pred_check_branch
      %34 = sbr.rel (0) target = $region37
    $region36: #{tpu_custom_call.1} parent=1 // pred_region
      _
    $region37: #{tpu_custom_call.1} parent=1 // pred_fallthru
      _
    %v35 = vld [vmem:[%s0] sm:$0x3]
    %v36 = vlaneseq
    %v37 = vshrl.u32 %v36, 7
    %v38 = vadd.s32 %v37, 8
    %v39 = vadd.s32 %v37, 16
    %v40 = vlaneseq
    %v41 = vshrl.u32 %v40, 7
    %v42 = vsub.s32 0, %v41
    %v43 = vrot.slane %v35, %v42
    %vm44 = vcmp.eq.s32.totalorder %v37, %v43
    %vm45 = vcmp.eq.s32.totalorder %v38, %v43
    %v46 = vsel %vm44, 1, 0
    %v47 = vsel %vm45, 1, 0
    %v48 = vcvt.s32.f32 %v46
    %v49 = vcvt.s32.f32 %v47
    %v50 = vlaneseq
    %v51 = vshrl.u32 %v50, 7
    %v52 = vsub.s32 1, %v51
    %v53 = vrot.slane %v35, %v52
    %vm54 = vcmp.eq.s32.totalorder %v37, %v53
    %vm55 = vcmp.eq.s32.totalorder %v38, %v53
    %vm56 = vcmp.eq.s32.totalorder %v39, %v53
    %v57 = vsel %vm54, 1, 0
    %v58 = vsel %vm55, 1, 0
    %v59 = vsel %vm56, 1, 0
    %v60 = vcvt.s32.f32 %v57
    %v61 = vcvt.s32.f32 %v58
    %v62 = vcvt.s32.f32 %v59
    %v63 = vld [vmem:[%s1] sm:$0xff]
    %v64 = vld [vmem:[%s1 + $0x8] sm:$0xff]
    %v65 = vld [vmem:[%s1 + $0x10] sm:$0xff]
    %v66 = vld [vmem:[%s1 + $0x18] sm:$0xff]
    %v67 = vld [vmem:[%s1 + $0x20] sm:$0xff]
    %v68 = vld [vmem:[%s1 + $0x28] sm:$0xff]
    %v69 = vld [vmem:[%s1 + $0x30] sm:$0xff]
    %v70 = vld [vmem:[%s1 + $0x38] sm:$0xff]
    %v71 = vld [vmem:[%s2] sm:$0xff]
    %v72 = vld [vmem:[%s2 + $0x8] sm:$0xff]
    %v73 = vld [vmem:[%s2 + $0x10] sm:$0xff]
    %v74 = vld [vmem:[%s2 + $0x18] sm:$0xff]
    %v75 = vld [vmem:[%s2 + $0x20] sm:$0xff]
    %v76 = vld [vmem:[%s2 + $0x28] sm:$0xff]
    %v77 = vld [vmem:[%s2 + $0x30] sm:$0xff]
    %v78 = vld [vmem:[%s2 + $0x38] sm:$0xff]
    %vm79 = vcmask 195584
    %v81 = vsel %vm79, %v71, 0
    %v84 = vsel %vm79, %v72, 0
    %v87 = vsel %vm79, %v73, 0
    %v90 = vsel %vm79, %v74, 0
    %v93 = vsel %vm79, %v75, 0
    %v96 = vsel %vm79, %v76, 0
    %v99 = vsel %vm79, %v77, 0
    %v102 = vsel %vm79, %v78, 0
    %104 = vmatprep.subr.mxu0 0.0
    %105 = vmatpush1.msra.mxu0 0.0
    %106 = vmatprep.subr.mxu0 0.0
    %107 = vmatpush1.msra.mxu0 0.0
    %108 = vmatprep.subr.mxu0 0.0
    %109 = vmatpush1.msra.mxu0 0.0
    %110 = vmatprep.subr.mxu0 0.0
    %111 = vmatpush1.msra.mxu0 0.0
    %112 = vmatprep.subr.mxu0 0.0
    %113 = vmatpush1.msra.mxu0 0.0
    %114 = vmatprep.subr.mxu0 0.0
    %115 = vmatpush1.msra.mxu0 0.0
    %116 = vmatprep.subr.mxu0 0.0
    %117 = vmatpush1.msra.mxu0 0.0
    %118 = vmatprep.subr.mxu0 0.0
    %119 = vmatpush1.msra.mxu0 0.0
    %120 = vmatprep.subr.mxu0 0.0
    %121 = vmatpush1.msra.mxu0 0.0
    %122 = vmatprep.subr.mxu0 0.0
    %123 = vmatpush1.msra.mxu0 0.0
    %124 = vmatprep.subr.mxu0 0.0
    %125 = vmatpush1.msra.mxu0 0.0
    %126 = vmatprep.subr.mxu0 0.0
    %127 = vmatpush1.msra.mxu0 0.0
    %128 = vmatprep.subr.mxu0 0.0
    %129 = vmatpush1.msra.mxu0 0.0
    %130 = vmatprep.subr.mxu0 0.0
    %131 = vmatpush1.msra.mxu0 %v62
    %132 = vmatprep.subr.mxu0 0.0
    %133 = vmatpush1.msra.mxu0 %v61
    %134 = vmatprep.subr.mxu0 0.0
    %135 = vmatpush1.msra.mxu0 %v60
    %136 = vmatprep.subr.mxu0 0.0
    %137 = vmatpush2.msra.mxu0 0.0
    %138 = vmatprep.subr.mxu0 0.0
    %139 = vmatpush2.msra.mxu0 0.0
    %140 = vmatprep.subr.mxu0 0.0
    %141 = vmatpush2.msra.mxu0 0.0
    %142 = vmatprep.subr.mxu0 0.0
    %143 = vmatpush2.msra.mxu0 0.0
    %144 = vmatprep.subr.mxu0 0.0
    %145 = vmatpush2.msra.mxu0 0.0
    %146 = vmatprep.subr.mxu0 0.0
    %147 = vmatpush2.msra.mxu0 0.0
    %148 = vmatprep.subr.mxu0 0.0
    %149 = vmatpush2.msra.mxu0 0.0
    %150 = vmatprep.subr.mxu0 0.0
    %151 = vmatpush2.msra.mxu0 0.0
    %152 = vmatprep.subr.mxu0 0.0
    %153 = vmatpush2.msra.mxu0 0.0
    %154 = vmatprep.subr.mxu0 0.0
    %155 = vmatpush2.msra.mxu0 0.0
    %156 = vmatprep.subr.mxu0 0.0
    %157 = vmatpush2.msra.mxu0 0.0
    %158 = vmatprep.subr.mxu0 0.0
    %159 = vmatpush2.msra.mxu0 0.0
    %160 = vmatprep.subr.mxu0 0.0
    %161 = vmatpush2.msra.mxu0 0.0
    %162 = vmatprep.subr.mxu0 0.0
    %163 = vmatpush2.msra.mxu0 0.0
    %164 = vmatprep.subr.mxu0 0.0
    %165 = vmatpush2.msra.mxu0 0.0
    %166 = vmatprep.subr.mxu0 0.0
    %167 = vmatpush2.msra.mxu0 0.0
    %168 = vmatprep.mubr.f32.mxu0 0.0
    %169 = vmatmul.mubr.f32.gmra.mxu0 %v81
    %v170 = vpop.f32.mrf.mxu0
    %v171 = vadd.f32 0.0, %v170
    %v172 = vpop.f32.mrf.mxu0
    %173 = vmatprep.mubr.f32.mxu0 0.0
    %174 = vmatmul.mubr.f32.gmra.mxu0 %v84
    %v175 = vpop.f32.mrf.mxu0
    %v176 = vadd.f32 0.0, %v175
    %v177 = vpop.f32.mrf.mxu0
    %178 = vmatprep.mubr.f32.mxu0 0.0
    %179 = vmatmul.mubr.f32.gmra.mxu0 %v87
    %v180 = vpop.f32.mrf.mxu0
    %v181 = vadd.f32 0.0, %v180
    %v182 = vpop.f32.mrf.mxu0
    %183 = vmatprep.mubr.f32.mxu0 0.0
    %184 = vmatmul.mubr.f32.gmra.mxu0 %v90
    %v185 = vpop.f32.mrf.mxu0
    %v186 = vadd.f32 0.0, %v185
    %v187 = vpop.f32.mrf.mxu0
    %188 = vmatprep.mubr.f32.mxu0 0.0
    %189 = vmatmul.mubr.f32.gmra.mxu0 %v93
    %v190 = vpop.f32.mrf.mxu0
    %v191 = vadd.f32 0.0, %v190
    %v192 = vpop.f32.mrf.mxu0
    %193 = vmatprep.mubr.f32.mxu0 0.0
    %194 = vmatmul.mubr.f32.gmra.mxu0 %v96
    %v195 = vpop.f32.mrf.mxu0
    %v196 = vadd.f32 0.0, %v195
    %v197 = vpop.f32.mrf.mxu0
    %198 = vmatprep.mubr.f32.mxu0 0.0
    %199 = vmatmul.mubr.f32.gmra.mxu0 %v99
    %v200 = vpop.f32.mrf.mxu0
    %v201 = vadd.f32 0.0, %v200
    %v202 = vpop.f32.mrf.mxu0
    %203 = vmatprep.mubr.f32.mxu0 0.0
    %204 = vmatmul.mubr.f32.gmra.mxu0 %v102
    %v205 = vpop.f32.mrf.mxu0
    %v206 = vadd.f32 0.0, %v205
    %v207 = vpop.f32.mrf.mxu0
    %208 = vdwg.mxu0
    %vm209 = vcmask 130048
    %v211 = vsel %vm209, %v63, 0
    %v214 = vsel %vm209, %v64, 0
    %v217 = vsel %vm209, %v65, 0
    %v220 = vsel %vm209, %v66, 0
    %v223 = vsel %vm209, %v67, 0
    %v226 = vsel %vm209, %v68, 0
    %v229 = vsel %vm209, %v69, 0
    %v232 = vsel %vm209, %v70, 0
    %234 = vmatprep.subr.mxu0 0.0
    %235 = vmatpush1.msra.mxu0 0.0
    %236 = vmatprep.subr.mxu0 0.0
    %237 = vmatpush1.msra.mxu0 0.0
    %238 = vmatprep.subr.mxu0 0.0
    %239 = vmatpush1.msra.mxu0 0.0
    %240 = vmatprep.subr.mxu0 0.0
    %241 = vmatpush1.msra.mxu0 0.0
    %242 = vmatprep.subr.mxu0 0.0
    %243 = vmatpush1.msra.mxu0 0.0
    %244 = vmatprep.subr.mxu0 0.0
    %245 = vmatpush1.msra.mxu0 0.0
    %246 = vmatprep.subr.mxu0 0.0
    %247 = vmatpush1.msra.mxu0 0.0
    %248 = vmatprep.subr.mxu0 0.0
    %249 = vmatpush1.msra.mxu0 0.0
    %250 = vmatprep.subr.mxu0 0.0
    %251 = vmatpush1.msra.mxu0 0.0
    %252 = vmatprep.subr.mxu0 0.0
    %253 = vmatpush1.msra.mxu0 0.0
    %254 = vmatprep.subr.mxu0 0.0
    %255 = vmatpush1.msra.mxu0 0.0
    %256 = vmatprep.subr.mxu0 0.0
    %257 = vmatpush1.msra.mxu0 0.0
    %258 = vmatprep.subr.mxu0 0.0
    %259 = vmatpush1.msra.mxu0 0.0
    %260 = vmatprep.subr.mxu0 0.0
    %261 = vmatpush1.msra.mxu0 0.0
    %262 = vmatprep.subr.mxu0 0.0
    %263 = vmatpush1.msra.mxu0 %v49
    %264 = vmatprep.subr.mxu0 0.0
    %265 = vmatpush1.msra.mxu0 %v48
    %266 = vmatprep.subr.mxu0 0.0
    %267 = vmatpush2.msra.mxu0 0.0
    %268 = vmatprep.subr.mxu0 0.0
    %269 = vmatpush2.msra.mxu0 0.0
    %270 = vmatprep.subr.mxu0 0.0
    %271 = vmatpush2.msra.mxu0 0.0
    %272 = vmatprep.subr.mxu0 0.0
    %273 = vmatpush2.msra.mxu0 0.0
    %274 = vmatprep.subr.mxu0 0.0
    %275 = vmatpush2.msra.mxu0 0.0
    %276 = vmatprep.subr.mxu0 0.0
    %277 = vmatpush2.msra.mxu0 0.0
    %278 = vmatprep.subr.mxu0 0.0
    %279 = vmatpush2.msra.mxu0 0.0
    %280 = vmatprep.subr.mxu0 0.0
    %281 = vmatpush2.msra.mxu0 0.0
    %282 = vmatprep.subr.mxu0 0.0
    %283 = vmatpush2.msra.mxu0 0.0
    %284 = vmatprep.subr.mxu0 0.0
    %285 = vmatpush2.msra.mxu0 0.0
    %286 = vmatprep.subr.mxu0 0.0
    %287 = vmatpush2.msra.mxu0 0.0
    %288 = vmatprep.subr.mxu0 0.0
    %289 = vmatpush2.msra.mxu0 0.0
    %290 = vmatprep.subr.mxu0 0.0
    %291 = vmatpush2.msra.mxu0 0.0
    %292 = vmatprep.subr.mxu0 0.0
    %293 = vmatpush2.msra.mxu0 0.0
    %294 = vmatprep.subr.mxu0 0.0
    %295 = vmatpush2.msra.mxu0 0.0
    %296 = vmatprep.subr.mxu0 0.0
    %297 = vmatpush2.msra.mxu0 0.0
    %298 = vmatprep.mubr.f32.mxu0 0.0
    %299 = vmatmul.mubr.f32.gmra.mxu0 %v211
    %v300 = vpop.f32.mrf.mxu0
    %v301 = vadd.f32 %v171, %v300
    %v302 = vpop.f32.mrf.mxu0
    %303 = vmatprep.mubr.f32.mxu0 0.0
    %304 = vmatmul.mubr.f32.gmra.mxu0 %v214
    %v305 = vpop.f32.mrf.mxu0
    %v306 = vadd.f32 %v176, %v305
    %v307 = vpop.f32.mrf.mxu0
    %308 = vmatprep.mubr.f32.mxu0 0.0
    %309 = vmatmul.mubr.f32.gmra.mxu0 %v217
    %v310 = vpop.f32.mrf.mxu0
    %v311 = vadd.f32 %v181, %v310
    %v312 = vpop.f32.mrf.mxu0
    %313 = vmatprep.mubr.f32.mxu0 0.0
    %314 = vmatmul.mubr.f32.gmra.mxu0 %v220
    %v315 = vpop.f32.mrf.mxu0
    %v316 = vadd.f32 %v186, %v315
    %v317 = vpop.f32.mrf.mxu0
    %318 = vmatprep.mubr.f32.mxu0 0.0
    %319 = vmatmul.mubr.f32.gmra.mxu0 %v223
    %v320 = vpop.f32.mrf.mxu0
    %v321 = vadd.f32 %v191, %v320
    %v322 = vpop.f32.mrf.mxu0
    %323 = vmatprep.mubr.f32.mxu0 0.0
    %324 = vmatmul.mubr.f32.gmra.mxu0 %v226
    %v325 = vpop.f32.mrf.mxu0
    %v326 = vadd.f32 %v196, %v325
    %v327 = vpop.f32.mrf.mxu0
    %328 = vmatprep.mubr.f32.mxu0 0.0
    %329 = vmatmul.mubr.f32.gmra.mxu0 %v229
    %v330 = vpop.f32.mrf.mxu0
    %v331 = vadd.f32 %v201, %v330
    %v332 = vpop.f32.mrf.mxu0
    %333 = vmatprep.mubr.f32.mxu0 0.0
    %334 = vmatmul.mubr.f32.gmra.mxu0 %v232
    %v335 = vpop.f32.mrf.mxu0
    %v336 = vadd.f32 %v206, %v335
    %v337 = vpop.f32.mrf.mxu0
    %338 = vdwg.mxu0
    %v339 = vmax.f32 %v301, 0.0
    %v340 = vmax.f32 %v306, 0.0
    %v341 = vmax.f32 %v311, 0.0
    %v342 = vmax.f32 %v316, 0.0
    %v343 = vmax.f32 %v321, 0.0
    %v344 = vmax.f32 %v326, 0.0
    %v345 = vmax.f32 %v331, 0.0
    %v346 = vmax.f32 %v336, 0.0
    %v347 = vld [vmem:[%s3] sm:$0xff]
    %v348 = vld [vmem:[%s3 + $0x8] sm:$0xff]
    %v349 = vld [vmem:[%s3 + $0x10] sm:$0xff]
    %v350 = vld [vmem:[%s3 + $0x18] sm:$0xff]
    %v351 = vld [vmem:[%s4] sm:$0xff]
    %v352 = vld [vmem:[%s4 + $0x8] sm:$0xff]
    %v353 = vld [vmem:[%s4 + $0x10] sm:$0xff]
    %v354 = vld [vmem:[%s4 + $0x18] sm:$0xff]
    %356 = vset.pattern.permute.xlu0 0
    %357 = vperm.xlu0 %356, %v351
    %v358 = vpop.permute.xlu0 %357
    %361 = vset.pattern.permute.xlu0 0
    %362 = vperm.xlu0 %361, %v352
    %v363 = vpop.permute.xlu0 %362
    %366 = vset.pattern.permute.xlu0 0
    %367 = vperm.xlu0 %366, %v353
    %v368 = vpop.permute.xlu0 %367
    %371 = vset.pattern.permute.xlu0 0
    %372 = vperm.xlu0 %371, %v354
    %v373 = vpop.permute.xlu0 %372
    %vm375 = vcmask 523264
    %v377 = vsel %vm375, %v347, 0
    %v380 = vsel %vm375, %v348, 0
    %v383 = vsel %vm375, %v349, 0
    %v386 = vsel %vm375, %v350, 0
    %388 = vmatprep.subr.mxu0 0.0
    %389 = vmatpush1.msra.mxu0 0.0
    %390 = vmatprep.subr.mxu0 0.0
    %391 = vmatpush1.msra.mxu0 0.0
    %392 = vmatprep.subr.mxu0 0.0
    %393 = vmatpush1.msra.mxu0 0.0
    %394 = vmatprep.subr.mxu0 0.0
    %395 = vmatpush1.msra.mxu0 0.0
    %396 = vmatprep.subr.mxu0 0.0
    %397 = vmatpush1.msra.mxu0 0.0
    %398 = vmatprep.subr.mxu0 0.0
    %399 = vmatpush1.msra.mxu0 0.0
    %400 = vmatprep.subr.mxu0 0.0
    %401 = vmatpush1.msra.mxu0 0.0
    %402 = vmatprep.subr.mxu0 0.0
    %403 = vmatpush1.msra.mxu0 0.0
    %404 = vmatprep.subr.mxu0 0.0
    %405 = vmatpush1.msra.mxu0 %v346
    %406 = vmatprep.subr.mxu0 0.0
    %407 = vmatpush1.msra.mxu0 %v345
    %408 = vmatprep.subr.mxu0 0.0
    %409 = vmatpush1.msra.mxu0 %v344
    %410 = vmatprep.subr.mxu0 0.0
    %411 = vmatpush1.msra.mxu0 %v343
    %412 = vmatprep.subr.mxu0 0.0
    %413 = vmatpush1.msra.mxu0 %v342
    %414 = vmatprep.subr.mxu0 0.0
    %415 = vmatpush1.msra.mxu0 %v341
    %416 = vmatprep.subr.mxu0 0.0
    %417 = vmatpush1.msra.mxu0 %v340
    %418 = vmatprep.subr.mxu0 0.0
    %419 = vmatpush1.msra.mxu0 %v339
    %420 = vmatprep.subr.mxu0 0.0
    %421 = vmatpush2.msra.mxu0 0.0
    %422 = vmatprep.subr.mxu0 0.0
    %423 = vmatpush2.msra.mxu0 0.0
    %424 = vmatprep.subr.mxu0 0.0
    %425 = vmatpush2.msra.mxu0 0.0
    %426 = vmatprep.subr.mxu0 0.0
    %427 = vmatpush2.msra.mxu0 0.0
    %428 = vmatprep.subr.mxu0 0.0
    %429 = vmatpush2.msra.mxu0 0.0
    %430 = vmatprep.subr.mxu0 0.0
    %431 = vmatpush2.msra.mxu0 0.0
    %432 = vmatprep.subr.mxu0 0.0
    %433 = vmatpush2.msra.mxu0 0.0
    %434 = vmatprep.subr.mxu0 0.0
    %435 = vmatpush2.msra.mxu0 0.0
    %436 = vmatprep.subr.mxu0 0.0
    %437 = vmatpush2.msra.mxu0 0.0
    %438 = vmatprep.subr.mxu0 0.0
    %439 = vmatpush2.msra.mxu0 0.0
    %440 = vmatprep.subr.mxu0 0.0
    %441 = vmatpush2.msra.mxu0 0.0
    %442 = vmatprep.subr.mxu0 0.0
    %443 = vmatpush2.msra.mxu0 0.0
    %444 = vmatprep.subr.mxu0 0.0
    %445 = vmatpush2.msra.mxu0 0.0
    %446 = vmatprep.subr.mxu0 0.0
    %447 = vmatpush2.msra.mxu0 0.0
    %448 = vmatprep.subr.mxu0 0.0
    %449 = vmatpush2.msra.mxu0 0.0
    %450 = vmatprep.subr.mxu0 0.0
    %451 = vmatpush2.msra.mxu0 0.0
    %452 = vmatprep.mubr.f32.mxu0 0.0
    %453 = vmatmul.mubr.f32.gmra.mxu0 %v377
    %v454 = vpop.f32.mrf.mxu0
    %v455 = vadd.f32 %v358, %v454
    %v456 = vpop.f32.mrf.mxu0
    %457 = vmatprep.mubr.f32.mxu0 0.0
    %458 = vmatmul.mubr.f32.gmra.mxu0 %v380
    %v459 = vpop.f32.mrf.mxu0
    %v460 = vadd.f32 %v363, %v459
    %v461 = vpop.f32.mrf.mxu0
    %462 = vmatprep.mubr.f32.mxu0 0.0
    %463 = vmatmul.mubr.f32.gmra.mxu0 %v383
    %v464 = vpop.f32.mrf.mxu0
    %v465 = vadd.f32 %v368, %v464
    %v466 = vpop.f32.mrf.mxu0
    %467 = vmatprep.mubr.f32.mxu0 0.0
    %468 = vmatmul.mubr.f32.gmra.mxu0 %v386
    %v469 = vpop.f32.mrf.mxu0
    %v470 = vadd.f32 %v373, %v469
    %v471 = vpop.f32.mrf.mxu0
    %472 = vdwg.mxu0
    %v473 = vmax.f32 %v455, 0.0
    %v474 = vmax.f32 %v460, 0.0
    %v475 = vmax.f32 %v465, 0.0
    %v476 = vmax.f32 %v470, 0.0
    %v477 = vld [vmem:[%s5] sm:$0xff]
    %v478 = vld [vmem:[%s5 + $0x8] sm:$0xff]
    %v479 = vld [vmem:[%s6] sm:$0xff]
    %v480 = vld [vmem:[%s6 + $0x8] sm:$0xff]
    %482 = vset.pattern.permute.xlu0 0
    %483 = vperm.xlu0 %482, %v479
    %v484 = vpop.permute.xlu0 %483
    %487 = vset.pattern.permute.xlu0 0
    %488 = vperm.xlu0 %487, %v480
    %v489 = vpop.permute.xlu0 %488
    %vm491 = vcmask 261120
    %v493 = vsel %vm491, %v477, 0
    %v496 = vsel %vm491, %v478, 0
    %498 = vmatprep.subr.mxu0 0.0
    %499 = vmatpush1.msra.mxu0 0.0
    %500 = vmatprep.subr.mxu0 0.0
    %501 = vmatpush1.msra.mxu0 0.0
    %502 = vmatprep.subr.mxu0 0.0
    %503 = vmatpush1.msra.mxu0 0.0
    %504 = vmatprep.subr.mxu0 0.0
    %505 = vmatpush1.msra.mxu0 0.0
    %506 = vmatprep.subr.mxu0 0.0
    %507 = vmatpush1.msra.mxu0 0.0
    %508 = vmatprep.subr.mxu0 0.0
    %509 = vmatpush1.msra.mxu0 0.0
    %510 = vmatprep.subr.mxu0 0.0
    %511 = vmatpush1.msra.mxu0 0.0
    %512 = vmatprep.subr.mxu0 0.0
    %513 = vmatpush1.msra.mxu0 0.0
    %514 = vmatprep.subr.mxu0 0.0
    %515 = vmatpush1.msra.mxu0 0.0
    %516 = vmatprep.subr.mxu0 0.0
    %517 = vmatpush1.msra.mxu0 0.0
    %518 = vmatprep.subr.mxu0 0.0
    %519 = vmatpush1.msra.mxu0 0.0
    %520 = vmatprep.subr.mxu0 0.0
    %521 = vmatpush1.msra.mxu0 0.0
    %522 = vmatprep.subr.mxu0 0.0
    %523 = vmatpush1.msra.mxu0 %v476
    %524 = vmatprep.subr.mxu0 0.0
    %525 = vmatpush1.msra.mxu0 %v475
    %526 = vmatprep.subr.mxu0 0.0
    %527 = vmatpush1.msra.mxu0 %v474
    %528 = vmatprep.subr.mxu0 0.0
    %529 = vmatpush1.msra.mxu0 %v473
    %530 = vmatprep.subr.mxu0 0.0
    %531 = vmatpush2.msra.mxu0 0.0
    %532 = vmatprep.subr.mxu0 0.0
    %533 = vmatpush2.msra.mxu0 0.0
    %534 = vmatprep.subr.mxu0 0.0
    %535 = vmatpush2.msra.mxu0 0.0
    %536 = vmatprep.subr.mxu0 0.0
    %537 = vmatpush2.msra.mxu0 0.0
    %538 = vmatprep.subr.mxu0 0.0
    %539 = vmatpush2.msra.mxu0 0.0
    %540 = vmatprep.subr.mxu0 0.0
    %541 = vmatpush2.msra.mxu0 0.0
    %542 = vmatprep.subr.mxu0 0.0
    %543 = vmatpush2.msra.mxu0 0.0
    %544 = vmatprep.subr.mxu0 0.0
    %545 = vmatpush2.msra.mxu0 0.0
    %546 = vmatprep.subr.mxu0 0.0
    %547 = vmatpush2.msra.mxu0 0.0
    %548 = vmatprep.subr.mxu0 0.0
    %549 = vmatpush2.msra.mxu0 0.0
    %550 = vmatprep.subr.mxu0 0.0
    %551 = vmatpush2.msra.mxu0 0.0
    %552 = vmatprep.subr.mxu0 0.0
    %553 = vmatpush2.msra.mxu0 0.0
    %554 = vmatprep.subr.mxu0 0.0
    %555 = vmatpush2.msra.mxu0 0.0
    %556 = vmatprep.subr.mxu0 0.0
    %557 = vmatpush2.msra.mxu0 0.0
    %558 = vmatprep.subr.mxu0 0.0
    %559 = vmatpush2.msra.mxu0 0.0
    %560 = vmatprep.subr.mxu0 0.0
    %561 = vmatpush2.msra.mxu0 0.0
    %562 = vmatprep.mubr.f32.mxu0 0.0
    %563 = vmatmul.mubr.f32.gmra.mxu0 %v493
    %v564 = vpop.f32.mrf.mxu0
    %v565 = vadd.f32 %v484, %v564
    %v566 = vpop.f32.mrf.mxu0
    %567 = vmatprep.mubr.f32.mxu0 0.0
    %568 = vmatmul.mubr.f32.gmra.mxu0 %v496
    %v569 = vpop.f32.mrf.mxu0
    %v570 = vadd.f32 %v489, %v569
    %v571 = vpop.f32.mrf.mxu0
    %572 = vdwg.mxu0
    %v573 = vmax.f32 %v565, 0.0
    %v574 = vmax.f32 %v570, 0.0
    %v575 = vld [vmem:[%s7] sm:$0x1]
    %v576 = vld [vmem:[#allocation2] sm:$0x1]
    %578 = vset.pattern.permute.xlu0 0
    %579 = vperm.xlu0 %578, %v576
    %v580 = vpop.permute.xlu0 %579
    %v582 = vlaneseq
    %v583 = vshrl.u32 %v582, 7
    %v584 = vsub.s32 0, %v583
    %v585 = vrot.slane %v580, %v584
    %v587 = vsel %vm209, %v575, 0
    %589 = vmatprep.subr.mxu0 0.0
    %590 = vmatpush1.msra.mxu0 0.0
    %591 = vmatprep.subr.mxu0 0.0
    %592 = vmatpush1.msra.mxu0 0.0
    %593 = vmatprep.subr.mxu0 0.0
    %594 = vmatpush1.msra.mxu0 0.0
    %595 = vmatprep.subr.mxu0 0.0
    %596 = vmatpush1.msra.mxu0 0.0
    %597 = vmatprep.subr.mxu0 0.0
    %598 = vmatpush1.msra.mxu0 0.0
    %599 = vmatprep.subr.mxu0 0.0
    %600 = vmatpush1.msra.mxu0 0.0
    %601 = vmatprep.subr.mxu0 0.0
    %602 = vmatpush1.msra.mxu0 0.0
    %603 = vmatprep.subr.mxu0 0.0
    %604 = vmatpush1.msra.mxu0 0.0
    %605 = vmatprep.subr.mxu0 0.0
    %606 = vmatpush1.msra.mxu0 0.0
    %607 = vmatprep.subr.mxu0 0.0
    %608 = vmatpush1.msra.mxu0 0.0
    %609 = vmatprep.subr.mxu0 0.0
    %610 = vmatpush1.msra.mxu0 0.0
    %611 = vmatprep.subr.mxu0 0.0
    %612 = vmatpush1.msra.mxu0 0.0
    %613 = vmatprep.subr.mxu0 0.0
    %614 = vmatpush1.msra.mxu0 0.0
    %615 = vmatprep.subr.mxu0 0.0
    %616 = vmatpush1.msra.mxu0 0.0
    %617 = vmatprep.subr.mxu0 0.0
    %618 = vmatpush1.msra.mxu0 %v574
    %619 = vmatprep.subr.mxu0 0.0
    %620 = vmatpush1.msra.mxu0 %v573
    %621 = vmatprep.subr.mxu0 0.0
    %622 = vmatpush2.msra.mxu0 0.0
    %623 = vmatprep.subr.mxu0 0.0
    %624 = vmatpush2.msra.mxu0 0.0
    %625 = vmatprep.subr.mxu0 0.0
    %626 = vmatpush2.msra.mxu0 0.0
    %627 = vmatprep.subr.mxu0 0.0
    %628 = vmatpush2.msra.mxu0 0.0
    %629 = vmatprep.subr.mxu0 0.0
    %630 = vmatpush2.msra.mxu0 0.0
    %631 = vmatprep.subr.mxu0 0.0
    %632 = vmatpush2.msra.mxu0 0.0
    %633 = vmatprep.subr.mxu0 0.0
    %634 = vmatpush2.msra.mxu0 0.0
    %635 = vmatprep.subr.mxu0 0.0
    %636 = vmatpush2.msra.mxu0 0.0
    %637 = vmatprep.subr.mxu0 0.0
    %638 = vmatpush2.msra.mxu0 0.0
    %639 = vmatprep.subr.mxu0 0.0
    %640 = vmatpush2.msra.mxu0 0.0
    %641 = vmatprep.subr.mxu0 0.0
    %642 = vmatpush2.msra.mxu0 0.0
    %643 = vmatprep.subr.mxu0 0.0
    %644 = vmatpush2.msra.mxu0 0.0
    %645 = vmatprep.subr.mxu0 0.0
    %646 = vmatpush2.msra.mxu0 0.0
    %647 = vmatprep.subr.mxu0 0.0
    %648 = vmatpush2.msra.mxu0 0.0
    %649 = vmatprep.subr.mxu0 0.0
    %650 = vmatpush2.msra.mxu0 0.0
    %651 = vmatprep.subr.mxu0 0.0
    %652 = vmatpush2.msra.mxu0 0.0
    %653 = vmatprep.mubr.f32.mxu0 0.0
    %654 = vmatmul.mubr.f32.gmra.mxu0 %v587
    %v655 = vpop.f32.mrf.mxu0
    %v656 = vadd.f32 %v585, %v655
    %v657 = vpop.f32.mrf.mxu0
    %658 = vdwg.mxu0
    %v659 = vxor.u32 %v656, 2147483648
    %v660 = vmul.f32 %v659, 1.442695
    %v661 = vpow.pop %v660
    %v662 = vadd.f32 %v661, 1.0
    %v663 = vrcp.pop %v662
    %v664 = vmul.f32 1.0, %v663
    %665 = vst [vmem:[#allocation3] sm:$0x1] %v664
    // Predicated region
    $region38: #{tpu_custom_call.1} parent=1 // pred_check
      _
    $region39: #{tpu_custom_call.1} parent=1 // pred_check_branch
      %667 = sbr.rel (0) target = $region41
    $region40: #{tpu_custom_call.1} parent=1 // pred_region
      %s669 = ssub.s32 16, 16
      %670 = vsyncadd [#allocation4], %s669
      %s672 = sshll.u32 [#allocation3], 4
      %s673 = int_to_ptr.vmem [resolvable:$true] %s672
      %675 = dma.vmem_to_hbm [thread:$0]  %s673, 16, %s9, [#allocation4]
    $region41: #{tpu_custom_call.1} parent=1 // pred_fallthru
      _
    // Predicated region
    $region42: #{tpu_custom_call.1} parent=1 // pred_check
      _
    $region43: #{tpu_custom_call.1} parent=1 // pred_check_branch
      %677 = sbr.rel (0) target = $region45
    $region44: #{tpu_custom_call.1} parent=1 // pred_region
      %678 = dma.done [#allocation4], 16
    $region45: #{tpu_custom_call.1} parent=1 // pred_fallthru
      _
    %679 = vsyncpa [#allocation4], 1

</llo_original>
